<compile_context>
chip_gen: v7x
topology: tpu7x:2x2x1
jax: 0.10.0
libtpu: 0.0.40
codegen_flags: <defaults>
</compile_context>

<pallas_src>
import functools

import jax
import jax.numpy as jnp
from jax.experimental import pallas as pl
from jax.experimental.pallas import tpu as pltpu


# ----------------------------- small helpers -------------------------------
def _round_up(n: int, m: int) -> int:
    return ((n + m - 1) // m) * m


def _pad_axis(x, axis, target):
    pad = target - x.shape[axis]
    if pad <= 0:
        return x
    widths = [(0, 0)] * x.ndim
    widths[axis] = (0, pad)
    return jnp.pad(x, widths)


def _pad2d(x, rows, cols):
    return _pad_axis(_pad_axis(x, 0, rows), 1, cols)


def _vmem_limit_bytes() -> int:
    """~80% of physical VMEM: ~51 MiB on v7x, ~102 MiB on v5e/v6e."""
    try:
        cap = int(pltpu.get_tpu_info().vmem_capacity_bytes)
    except Exception:   # query unavailable -> conservative (v7x-sized) default
        cap = 64 * 1024 * 1024
    return int(cap * 0.8)


def _const_spec(shape, single_buffer):
    """BlockSpec for a grid-invariant operand (constant index map)."""
    index_map = lambda bi, pi: (0, 0)
    if single_buffer:
        # Constant blocks don't need the default double-buffering; halving
        # their VMEM footprint frees budget for a larger xp tile.
        return pl.BlockSpec(shape, index_map, pipeline_mode=pl.Buffered(1))
    return pl.BlockSpec(shape, index_map)


# ----------------------------------------------------------------------------
# Fused kernel: patch pooling (running f32 accumulator) + patch-embed +
# visual projection + classifier, all on the MXU inside one pipelined call.
#   grid = (B_pad // TB  [parallel],  P_pad // TP  [arbitrary, reduction])
# ----------------------------------------------------------------------------
def _make_fused_kernel(tb, tp, kp, inv_n_patches):
    def kernel(xp_ref, pool_ref, pw_ref, pb_ref, vw_ref, vb_ref,
               cw_ref, cb_ref, feat_ref, logit_ref, acc_ref):
        pi = pl.program_id(1)          # patch-chunk index (innermost axis)

        @pl.when(pi == 0)
        def _init():
            acc_ref[...] = jnp.zeros_like(acc_ref)

        # Pool the RAW patch rows first (the stand-in encoder is linear, so
        # mean-then-embed == embed-then-mean).  The block-diagonal ones matrix
        # [tb, tb*tp] sums the tp patch rows of each batch row on the MXU;
        # the running sum lives in an f32 VMEM accumulator.
        x2 = xp_ref[...].reshape(tb * tp, kp)
        acc_ref[...] += jnp.dot(pool_ref[...], x2,
                                preferred_element_type=jnp.float32)

        # Last patch chunk: mean -> patch-embed -> visual projection ->
        # classifier, all in VMEM (no HBM round-trip between stages).
        @pl.when(pi == pl.num_programs(1) - 1)
        def _finalize():
            mean_row = (acc_ref[...] * inv_n_patches).astype(jnp.bfloat16)
            pooled = (jnp.dot(mean_row, pw_ref[...],
                              preferred_element_type=jnp.float32)
                      + pb_ref[...].astype(jnp.float32))
            feats = (jnp.dot(pooled.astype(jnp.bfloat16), vw_ref[...],
                             preferred_element_type=jnp.float32)
                     + vb_ref[...].astype(jnp.float32))
            feat_ref[...] = feats.astype(feat_ref.dtype)   # encode_image(x).float()
            logits = (jnp.dot(feats.astype(jnp.bfloat16), cw_ref[...],
                              preferred_element_type=jnp.float32)
                      + cb_ref[...])                       # f32 bias add
            logit_ref[...] = logits.astype(logit_ref.dtype)

    return kernel


def clip_finetuner_fused(xp, pool, patch_w, patch_b, proj_w, proj_b,
                         cls_w, cls_b, *, n_patches_real, tb, tp,
                         vmem_limit, single_buffer_consts=True):
    """Fused encode_image + classifier.

    xp:   [B_pad, P_pad, Kp_pad] bf16 patch rows (padding rows/cols are zero).
    pool: [tb, tb*tp] bf16 block-diagonal pooling matrix.
    Returns (features [B_pad, D_pad] f32, logits [B_pad, C_pad] f32).
    """
    bp, pp, kp = xp.shape
    kp2, ep = patch_w.shape
    ep2, dp = proj_w.shape
    dp2, cp = cls_w.shape
    assert kp == kp2 and ep == ep2 and dp == dp2
    assert bp % tb == 0 and pp % tp == 0 and pool.shape == (tb, tb * tp)
    grid = (bp // tb, pp // tp)
    kernel = _make_fused_kernel(tb, tp, kp, 1.0 / float(n_patches_real))

    # Advisory cost estimate so XLA schedules surrounding ops sensibly.
    flops = 2 * tb * bp * pp * kp + 2 * bp * (kp * ep + ep * dp + dp * cp)
    bytes_accessed = (bp * pp * kp * 2 + tb * tb * tp * 2
                      + (kp * ep + ep + ep * dp + dp + dp * cp) * 2 + cp * 4
                      + bp * dp * 4 + bp * cp * 4)

    in_specs = [
        pl.BlockSpec((tb, tp, kp), lambda bi, pi: (bi, pi, 0)),
        _const_spec((tb, tb * tp), single_buffer_consts),
        _const_spec((kp, ep), single_buffer_consts),
        _const_spec((1, ep), single_buffer_consts),
        _const_spec((ep, dp), single_buffer_consts),
        _const_spec((1, dp), single_buffer_consts),
        _const_spec((dp, cp), single_buffer_consts),
        _const_spec((1, cp), single_buffer_consts),
    ]
    # TODO(synk): with a single batch tile one v7x TensorCore idles; a per-core
    # split of the patch reduction (partial accumulators + combine) would fix
    # that for tiny batches.
    return pl.pallas_call(
        kernel,
        out_shape=(jax.ShapeDtypeStruct((bp, dp), jnp.float32),
                   jax.ShapeDtypeStruct((bp, cp), jnp.float32)),
        grid=grid,
        in_specs=in_specs,
        out_specs=(pl.BlockSpec((tb, dp), lambda bi, pi: (bi, 0)),
                   pl.BlockSpec((tb, cp), lambda bi, pi: (bi, 0))),
        scratch_shapes=[pltpu.VMEM((tb, kp), jnp.float32)],
        compiler_params=pltpu.CompilerParams(
            dimension_semantics=("parallel", "arbitrary"),
            vmem_limit_bytes=vmem_limit),
        cost_estimate=pl.CostEstimate(flops=flops, transcendentals=0,
                                      bytes_accessed=bytes_accessed),
    )(xp, pool, patch_w, patch_b, proj_w, proj_b, cls_w, cls_b)


# ----------------------------------------------------------------------------
# Model definition (synthetic, deterministic parameters)
# ----------------------------------------------------------------------------
class CLIPFineTunerPallas:
    """Mirrors CLIPFineTuner.forward:
         features = model.encode_image(x).float()   # frozen (no_grad)
         logits   = classifier(features)
       Forward-only: torch.no_grad has no effect on the forward values, so the
       frozen encoder and the trainable classifier are fused in one kernel.
    """

    def __init__(self, key, *, in_channels, image_size, patch_size,
                 embed_dim, output_dim, num_classes):
        self.patch_size = patch_size
        self.image_size = image_size
        self.in_channels = in_channels
        self.embed_dim = embed_dim
        self.output_dim = output_dim
        self.num_classes = num_classes

        kp = in_channels * patch_size * patch_size
        # lane-aligned (multiple-of-128) padded dims; padded rows/cols are
        # zero, so they are numerically inert and simply sliced off at the end.
        self.kp_pad = _round_up(kp, 128)
        self.e_pad = _round_up(embed_dim, 128)
        self.d_pad = _round_up(output_dim, 128)
        self.c_pad = _round_up(num_classes, 128)

        k = jax.random.split(key, 4)
        # "frozen CLIP" visual encoder parameters (bf16, like CLIP fp16)
        pw = jax.random.normal(k[0], (kp, embed_dim), jnp.float32) * 0.02
        vw = jax.random.normal(k[1], (embed_dim, output_dim), jnp.float32) * 0.02
        self.patch_w = _pad2d(pw, self.kp_pad, self.e_pad).astype(jnp.bfloat16)
        self.patch_b = jnp.zeros((1, self.e_pad), jnp.bfloat16)
        self.proj_w = _pad2d(vw, self.e_pad, self.d_pad).astype(jnp.bfloat16)
        self.proj_b = jnp.zeros((1, self.d_pad), jnp.bfloat16)

        # classifier = nn.Linear(output_dim, num_classes): f32 master weights,
        # bf16 MXU copy precomputed once (f32 accumulate + f32 bias in-kernel).
        bound = 1.0 / (output_dim ** 0.5)
        cw = jax.random.uniform(k[2], (output_dim, num_classes),
                                jnp.float32, -bound, bound)
        cb = jax.random.uniform(k[3], (1, num_classes),
                                jnp.float32, -bound, bound)
        self.cls_w = _pad2d(cw, self.d_pad, self.c_pad)          # f32 master
        self.cls_b = _pad2d(cb, 1, self.c_pad)                   # f32
        self.cls_w_bf16 = self.cls_w.astype(jnp.bfloat16)

        self._vmem_limit = _vmem_limit_bytes()
        self._pool_cache = {}
        self._single_buffer_consts = None    # feature-detected on first call

    # ---- tiling ----------------------------------------------------------
    def _pick_tiles(self, batch, n_patches):
        """Largest (TB, TP) fitting the VMEM budget: double-buffered xp tile,
        single-buffered weights, f32 accumulator and finalize temporaries."""
        budget = int(self._vmem_limit * 0.85)   # headroom for compiler scratch
        const_bytes = (self.kp_pad * self.e_pad * 2 + self.e_pad * 2
                       + self.e_pad * self.d_pad * 2 + self.d_pad * 2
                       + self.d_pad * self.c_pad * 2 + self.c_pad * 4)

        def usage(tb, tp):
            pool_b = tb * tb * tp * 2                        # pooling matrix
            xp_b = 2 * tb * tp * self.kp_pad * 2             # double-buffered input
            out_b = 2 * tb * (self.d_pad + self.c_pad) * 4   # double-buffered outputs
            acc_b = tb * self.kp_pad * 4                     # f32 scratch accumulator
            tmp_b = 2 * tb * self.kp_pad * 4                 # finalize temporaries
            return const_bytes + pool_b + xp_b + out_b + acc_b + tmp_b

        tb = min(128, _round_up(batch, 8))
        tp_cap = min(256, _round_up(n_patches, 16))
        tp_opts = [t for t in (256, 128, 64, 32, 16) if t <= tp_cap]
        if tp_cap not in tp_opts:
            tp_opts.insert(0, tp_cap)
        tp = next((t for t in tp_opts if usage(tb, t) <= budget), 16)
        while tb > 8 and usage(tb, tp) > budget:
            tb = max(8, _round_up(tb // 2, 8))
        return tb, tp

    def _pool_matrix(self, tb, tp):
        # block-diagonal ones: row b has ones on columns [b*tp, (b+1)*tp)
        key = (tb, tp)
        if key not in self._pool_cache:
            self._pool_cache[key] = jnp.repeat(
                jnp.eye(tb, dtype=jnp.bfloat16), tp, axis=1)
        return self._pool_cache[key]

    # ---- synthetic model.encode_image patch extraction -------------------
    def _patches(self, x_nchw):
        B, C, H, W = x_nchw.shape
        p = self.patch_size
        assert H % p == 0 and W % p == 0
        # TODO(synk): this reshape/transpose materializes a patch-major copy in
        # HBM; a production path would accept pre-patchified / NHWC input or
        # gather patch rows with an in-kernel strided DMA to save one HBM pass.
        xp = x_nchw.reshape(B, C, H // p, p, W // p, p)
        xp = xp.transpose(0, 2, 4, 1, 3, 5).reshape(
            B, (H // p) * (W // p), C * p * p)
        return xp

    # ---- fused forward ----------------------------------------------------
    def _forward_padded(self, x_nchw):
        B = x_nchw.shape[0]
        xp = self._patches(x_nchw).astype(jnp.bfloat16)
        n_patches = xp.shape[1]
        tb, tp = self._pick_tiles(B, n_patches)
        xp = _pad_axis(xp, 2, self.kp_pad)                 # lane dim -> 128x
        xp = _pad_axis(xp, 1, _round_up(n_patches, tp))    # zero patches add 0
        xp = _pad_axis(xp, 0, _round_up(B, tb))            # zero batch rows
        call = functools.partial(
            clip_finetuner_fused,
            xp, self._pool_matrix(tb, tp),
            self.patch_w, self.patch_b, self.proj_w, self.proj_b,
            self.cls_w_bf16, self.cls_b,
            n_patches_real=n_patches, tb=tb, tp=tp,
            vmem_limit=self._vmem_limit)
        if self._single_buffer_consts is None:
            try:
                out = call(single_buffer_consts=True)
                jax.block_until_ready(out)
                self._single_buffer_consts = True
                return out
            except Exception:
                # pipeline_mode=pl.Buffered(1) unsupported on this jax/Mosaic
                # build -> fall back to default double-buffered constants.
                self._single_buffer_consts = False
        return call(single_buffer_consts=self._single_buffer_consts)

    def encode_image(self, x_nchw):
        B = x_nchw.shape[0]
        feats, _ = self._forward_padded(x_nchw)
        return feats[:B, :self.output_dim]

    # ---- CLIPFineTuner.forward --------------------------------------------
    def __call__(self, x_nchw):
        B = x_nchw.shape[0]
        _, logits = self._forward_padded(x_nchw)
        return logits[:B, :self.num_classes]


# ----------------------------------------------------------------------------
def _reference_forward(model, x_nchw):
    """Pure-JAX reference (same bf16 weights, f32 math) for a tolerance check."""
    xp = model._patches(x_nchw).astype(jnp.bfloat16).astype(jnp.float32)
    xp = _pad_axis(xp, 2, model.kp_pad)
    mean_row = xp.mean(axis=1)                                   # [B, Kp_pad]
    pooled = (mean_row @ model.patch_w.astype(jnp.float32)
              + model.patch_b.astype(jnp.float32))
    feats = (pooled @ model.proj_w.astype(jnp.float32)
             + model.proj_b.astype(jnp.float32))
    logits = feats @ model.cls_w + model.cls_b
    return logits[:, :model.num_classes]


if __name__ == "__main__":
    key = jax.random.PRNGKey(0)
    k_param, k_data = jax.random.split(key)

    # small shapes: batch=2, channels=4, spatial=16x16, patch=8 -> 4 patches
    B, C, H, W = 2, 4, 16, 16
    model = CLIPFineTunerPallas(
        k_param,
        in_channels=C, image_size=H, patch_size=8,
        embed_dim=32, output_dim=32, num_classes=8,
    )

    x = jax.random.normal(k_data, (B, C, H, W), jnp.float32)   # NCHW
    logits = model(x)
    jax.block_until_ready(logits)

    assert logits.shape == (B, 8) and logits.dtype == jnp.float32
    assert bool(jnp.all(jnp.isfinite(logits)))

    ref = _reference_forward(model, x)
    err = float(jnp.max(jnp.abs(logits - ref)))
    assert err < 2e-2, f"mismatch vs pure-JAX reference: max abs err {err}"
    print("KERNEL_OK")
</pallas_src>

<mosaic_0001>
module attributes {stable_mosaic.version = 11 : i64} {
  func.func @kernel(%arg0: i32, %arg1: i32, %arg2: memref<8x16x256xbf16, #tpu.memory_space<vmem>>, %arg3: memref<8x128xbf16, #tpu.memory_space<vmem>>, %arg4: memref<256x128xbf16, #tpu.memory_space<vmem>>, %arg5: memref<1x128xbf16, #tpu.memory_space<vmem>>, %arg6: memref<128x128xbf16, #tpu.memory_space<vmem>>, %arg7: memref<1x128xbf16, #tpu.memory_space<vmem>>, %arg8: memref<128x128xbf16, #tpu.memory_space<vmem>>, %arg9: memref<1x128xf32, #tpu.memory_space<vmem>>, %arg10: memref<8x128xf32, #tpu.memory_space<vmem>>, %arg11: memref<8x128xf32, #tpu.memory_space<vmem>>, %arg12: memref<8x256xf32, #tpu.memory_space<vmem>>) attributes {dimension_semantics = [#tpu.dimension_semantics<parallel>, #tpu.dimension_semantics<arbitrary>], iteration_bounds = array<i64: 1, 1>, scalar_prefetch = 0 : i64, scratch_operands = 1 : i64, tpu.core_type = #tpu.core_type<tc>, window_params = [{transform_indices = @transform_0, window_bounds = array<i64: 8, 16, 256>}, {pipeline_mode = #tpu.pipeline_mode<synchronous>, transform_indices = @transform_1, window_bounds = array<i64: 8, 128>}, {pipeline_mode = #tpu.pipeline_mode<synchronous>, transform_indices = @transform_2, window_bounds = array<i64: 256, 128>}, {pipeline_mode = #tpu.pipeline_mode<synchronous>, transform_indices = @transform_3, window_bounds = array<i64: 1, 128>}, {pipeline_mode = #tpu.pipeline_mode<synchronous>, transform_indices = @transform_4, window_bounds = array<i64: 128, 128>}, {pipeline_mode = #tpu.pipeline_mode<synchronous>, transform_indices = @transform_5, window_bounds = array<i64: 1, 128>}, {pipeline_mode = #tpu.pipeline_mode<synchronous>, transform_indices = @transform_6, window_bounds = array<i64: 128, 128>}, {pipeline_mode = #tpu.pipeline_mode<synchronous>, transform_indices = @transform_7, window_bounds = array<i64: 1, 128>}, {transform_indices = @transform_8, window_bounds = array<i64: 8, 128>}, {transform_indices = @transform_9, window_bounds = array<i64: 8, 128>}]} {
    %c0_i32 = arith.constant 0 : i32
    %0 = arith.cmpi eq, %arg1, %c0_i32 : i32
    %1 = arith.extui %0 : i1 to i32
    %c0_i32_0 = arith.constant 0 : i32
    %2 = arith.cmpi ne, %1, %c0_i32_0 : i32
    scf.if %2 {
      %cst_11 = arith.constant 0.000000e+00 : f32
      %13 = vector.broadcast %cst_11 : f32 to vector<8x256xf32>
      %c0_12 = arith.constant 0 : index
      %c0_13 = arith.constant 0 : index
      %14 = vector.load %arg12[%c0_12, %c0_13] : memref<8x256xf32, #tpu.memory_space<vmem>>, vector<8x256xf32>
      tpu.vector_store %arg12[%c0_12, %c0_13], %13 {strides = array<i32>} : memref<8x256xf32, #tpu.memory_space<vmem>>, vector<8x256xf32>,
    } else {
    }
    %c0 = arith.constant 0 : index
    %c0_1 = arith.constant 0 : index
    %c0_2 = arith.constant 0 : index
    %3 = vector.load %arg2[%c0, %c0_1, %c0_2] : memref<8x16x256xbf16, #tpu.memory_space<vmem>>, vector<8x16x256xbf16>
    %4 = vector.shape_cast %3 : vector<8x16x256xbf16> to vector<128x256xbf16>
    %c0_3 = arith.constant 0 : index
    %c0_4 = arith.constant 0 : index
    %5 = vector.load %arg12[%c0_3, %c0_4] : memref<8x256xf32, #tpu.memory_space<vmem>>, vector<8x256xf32>
    %c0_5 = arith.constant 0 : index
    %c0_6 = arith.constant 0 : index
    %6 = vector.load %arg3[%c0_5, %c0_6] : memref<8x128xbf16, #tpu.memory_space<vmem>>, vector<8x128xbf16>
    %cst = arith.constant dense<0.000000e+00> : vector<8x256xf32>
    %7 = tpu.matmul %6, %4, %cst {dimension_numbers = #tpu.dot_dimension_numbers<[1], [0], [0], [1], [0, 0, 1, 1], [], []>} : vector<8x128xbf16>, vector<128x256xbf16>, vector<8x256xf32> -> vector<8x256xf32>
    %8 = arith.addf %5, %7 : vector<8x256xf32>
    %c0_7 = arith.constant 0 : index
    %c0_8 = arith.constant 0 : index
    %9 = vector.load %arg12[%c0_7, %c0_8] : memref<8x256xf32, #tpu.memory_space<vmem>>, vector<8x256xf32>
    tpu.vector_store %arg12[%c0_7, %c0_8], %8 {strides = array<i32>} : memref<8x256xf32, #tpu.memory_space<vmem>>, vector<8x256xf32>,
    %c0_i32_9 = arith.constant 0 : i32
    %10 = arith.cmpi eq, %arg1, %c0_i32_9 : i32
    %11 = arith.extui %10 : i1 to i32
    %c0_i32_10 = arith.constant 0 : i32
    %12 = arith.cmpi ne, %11, %c0_i32_10 : i32
    scf.if %12 {
      %c0_11 = arith.constant 0 : index
      %c0_12 = arith.constant 0 : index
      %13 = vector.load %arg12[%c0_11, %c0_12] : memref<8x256xf32, #tpu.memory_space<vmem>>, vector<8x256xf32>
      %cst_13 = arith.constant 2.500000e-01 : f32
      %14 = vector.broadcast %cst_13 : f32 to vector<8x256xf32>
      %15 = arith.mulf %13, %14 : vector<8x256xf32>
      %16 = arith.truncf %15 : vector<8x256xf32> to vector<8x256xbf16>
      %c0_14 = arith.constant 0 : index
      %c0_15 = arith.constant 0 : index
      %17 = vector.load %arg4[%c0_14, %c0_15] : memref<256x128xbf16, #tpu.memory_space<vmem>>, vector<256x128xbf16>
      %cst_16 = arith.constant dense<0.000000e+00> : vector<8x128xf32>
      %18 = tpu.matmul %16, %17, %cst_16 {dimension_numbers = #tpu.dot_dimension_numbers<[1], [0], [0], [1], [0, 0, 1, 1], [], []>} : vector<8x256xbf16>, vector<256x128xbf16>, vector<8x128xf32> -> vector<8x128xf32>
      %c0_17 = arith.constant 0 : index
      %c0_18 = arith.constant 0 : index
      %19 = vector.load %arg5[%c0_17, %c0_18] : memref<1x128xbf16, #tpu.memory_space<vmem>>, vector<1x128xbf16>
      %20 = arith.extf %19 : vector<1x128xbf16> to vector<1x128xf32>
      %21 = vector.broadcast %20 : vector<1x128xf32> to vector<8x128xf32>
      %22 = arith.addf %18, %21 : vector<8x128xf32>
      %23 = arith.truncf %22 : vector<8x128xf32> to vector<8x128xbf16>
      %c0_19 = arith.constant 0 : index
      %c0_20 = arith.constant 0 : index
      %24 = vector.load %arg6[%c0_19, %c0_20] : memref<128x128xbf16, #tpu.memory_space<vmem>>, vector<128x128xbf16>
      %cst_21 = arith.constant dense<0.000000e+00> : vector<8x128xf32>
      %25 = tpu.matmul %23, %24, %cst_21 {dimension_numbers = #tpu.dot_dimension_numbers<[1], [0], [0], [1], [0, 0, 1, 1], [], []>} : vector<8x128xbf16>, vector<128x128xbf16>, vector<8x128xf32> -> vector<8x128xf32>
      %c0_22 = arith.constant 0 : index
      %c0_23 = arith.constant 0 : index
      %26 = vector.load %arg7[%c0_22, %c0_23] : memref<1x128xbf16, #tpu.memory_space<vmem>>, vector<1x128xbf16>
      %27 = arith.extf %26 : vector<1x128xbf16> to vector<1x128xf32>
      %28 = vector.broadcast %27 : vector<1x128xf32> to vector<8x128xf32>
      %29 = arith.addf %25, %28 : vector<8x128xf32>
      %c0_24 = arith.constant 0 : index
      %c0_25 = arith.constant 0 : index
      %30 = vector.load %arg10[%c0_24, %c0_25] : memref<8x128xf32, #tpu.memory_space<vmem>>, vector<8x128xf32>
      tpu.vector_store %arg10[%c0_24, %c0_25], %29 {strides = array<i32>} : memref<8x128xf32, #tpu.memory_space<vmem>>, vector<8x128xf32>,
      %31 = arith.truncf %29 : vector<8x128xf32> to vector<8x128xbf16>
      %c0_26 = arith.constant 0 : index
      %c0_27 = arith.constant 0 : index
      %32 = vector.load %arg8[%c0_26, %c0_27] : memref<128x128xbf16, #tpu.memory_space<vmem>>, vector<128x128xbf16>
      %cst_28 = arith.constant dense<0.000000e+00> : vector<8x128xf32>
      %33 = tpu.matmul %31, %32, %cst_28 {dimension_numbers = #tpu.dot_dimension_numbers<[1], [0], [0], [1], [0, 0, 1, 1], [], []>} : vector<8x128xbf16>, vector<128x128xbf16>, vector<8x128xf32> -> vector<8x128xf32>
      %c0_29 = arith.constant 0 : index
      %c0_30 = arith.constant 0 : index
      %34 = vector.load %arg9[%c0_29, %c0_30] : memref<1x128xf32, #tpu.memory_space<vmem>>, vector<1x128xf32>
      %35 = vector.broadcast %34 : vector<1x128xf32> to vector<8x128xf32>
      %36 = arith.addf %33, %35 : vector<8x128xf32>
      %c0_31 = arith.constant 0 : index
      %c0_32 = arith.constant 0 : index
      %37 = vector.load %arg11[%c0_31, %c0_32] : memref<8x128xf32, #tpu.memory_space<vmem>>, vector<8x128xf32>
      tpu.vector_store %arg11[%c0_31, %c0_32], %36 {strides = array<i32>} : memref<8x128xf32, #tpu.memory_space<vmem>>, vector<8x128xf32>,
    } else {
    }
    return
  }
  func.func @transform_0(%arg0: i32, %arg1: i32) -> (i32, i32, i32) {
    %c0_i32 = arith.constant 0 : i32
    %c0_i32_0 = arith.constant 0 : i32
    return %arg0, %arg1, %c0_i32 : i32, i32, i32
  }
  func.func @transform_1(%arg0: i32, %arg1: i32) -> (i32, i32) {
    %c0_i32 = arith.constant 0 : i32
    %c0_i32_0 = arith.constant 0 : i32
    %c0_i32_1 = arith.constant 0 : i32
    return %c0_i32, %c0_i32_0 : i32, i32
  }
  func.func @transform_2(%arg0: i32, %arg1: i32) -> (i32, i32) {
    %c0_i32 = arith.constant 0 : i32
    %c0_i32_0 = arith.constant 0 : i32
    %c0_i32_1 = arith.constant 0 : i32
    return %c0_i32, %c0_i32_0 : i32, i32
  }
  func.func @transform_3(%arg0: i32, %arg1: i32) -> (i32, i32) {
    %c0_i32 = arith.constant 0 : i32
    %c0_i32_0 = arith.constant 0 : i32
    %c0_i32_1 = arith.constant 0 : i32
    return %c0_i32, %c0_i32_0 : i32, i32
  }
  func.func @transform_4(%arg0: i32, %arg1: i32) -> (i32, i32) {
    %c0_i32 = arith.constant 0 : i32
    %c0_i32_0 = arith.constant 0 : i32
    %c0_i32_1 = arith.constant 0 : i32
    return %c0_i32, %c0_i32_0 : i32, i32
  }
  func.func @transform_5(%arg0: i32, %arg1: i32) -> (i32, i32) {
    %c0_i32 = arith.constant 0 : i32
    %c0_i32_0 = arith.constant 0 : i32
    %c0_i32_1 = arith.constant 0 : i32
    return %c0_i32, %c0_i32_0 : i32, i32
  }
  func.func @transform_6(%arg0: i32, %arg1: i32) -> (i32, i32) {
    %c0_i32 = arith.constant 0 : i32
    %c0_i32_0 = arith.constant 0 : i32
    %c0_i32_1 = arith.constant 0 : i32
    return %c0_i32, %c0_i32_0 : i32, i32
  }
  func.func @transform_7(%arg0: i32, %arg1: i32) -> (i32, i32) {
    %c0_i32 = arith.constant 0 : i32
    %c0_i32_0 = arith.constant 0 : i32
    %c0_i32_1 = arith.constant 0 : i32
    return %c0_i32, %c0_i32_0 : i32, i32
  }
  func.func @transform_8(%arg0: i32, %arg1: i32) -> (i32, i32) {
    %c0_i32 = arith.constant 0 : i32
    %c0_i32_0 = arith.constant 0 : i32
    return %arg0, %c0_i32 : i32, i32
  }
  func.func @transform_9(%arg0: i32, %arg1: i32) -> (i32, i32) {
    %c0_i32 = arith.constant 0 : i32
    %c0_i32_0 = arith.constant 0 : i32
    return %arg0, %c0_i32 : i32, i32
  }
}

module attributes {stable_mosaic.version = 11 : i64} {
  func.func @kernel(%arg0: i32, %arg1: i32, %arg2: memref<8x16x256xbf16, #tpu.memory_space<vmem>>, %arg3: memref<8x128xbf16, #tpu.memory_space<vmem>>, %arg4: memref<256x128xbf16, #tpu.memory_space<vmem>>, %arg5: memref<1x128xbf16, #tpu.memory_space<vmem>>, %arg6: memref<128x128xbf16, #tpu.memory_space<vmem>>, %arg7: memref<1x128xbf16, #tpu.memory_space<vmem>>, %arg8: memref<128x128xbf16, #tpu.memory_space<vmem>>, %arg9: memref<1x128xf32, #tpu.memory_space<vmem>>, %arg10: memref<8x128xf32, #tpu.memory_space<vmem>>, %arg11: memref<8x128xf32, #tpu.memory_space<vmem>>, %arg12: memref<8x256xf32, #tpu.memory_space<vmem>>) attributes {dimension_semantics = [#tpu.dimension_semantics<parallel>, #tpu.dimension_semantics<arbitrary>], iteration_bounds = array<i64: 1, 1>, scalar_prefetch = 0 : i64, scratch_operands = 1 : i64, tpu.core_type = #tpu.core_type<tc>, window_params = [{transform_indices = @transform_0, window_bounds = array<i64: 8, 16, 256>}, {pipeline_mode = #tpu.pipeline_mode<synchronous>, transform_indices = @transform_1, window_bounds = array<i64: 8, 128>}, {pipeline_mode = #tpu.pipeline_mode<synchronous>, transform_indices = @transform_2, window_bounds = array<i64: 256, 128>}, {pipeline_mode = #tpu.pipeline_mode<synchronous>, transform_indices = @transform_3, window_bounds = array<i64: 1, 128>}, {pipeline_mode = #tpu.pipeline_mode<synchronous>, transform_indices = @transform_4, window_bounds = array<i64: 128, 128>}, {pipeline_mode = #tpu.pipeline_mode<synchronous>, transform_indices = @transform_5, window_bounds = array<i64: 1, 128>}, {pipeline_mode = #tpu.pipeline_mode<synchronous>, transform_indices = @transform_6, window_bounds = array<i64: 128, 128>}, {pipeline_mode = #tpu.pipeline_mode<synchronous>, transform_indices = @transform_7, window_bounds = array<i64: 1, 128>}, {transform_indices = @transform_8, window_bounds = array<i64: 8, 128>}, {transform_indices = @transform_9, window_bounds = array<i64: 8, 128>}]} {
    %c0_i32 = arith.constant 0 : i32
    %0 = arith.cmpi eq, %arg1, %c0_i32 : i32
    %1 = arith.extui %0 : i1 to i32
    %c0_i32_0 = arith.constant 0 : i32
    %2 = arith.cmpi ne, %1, %c0_i32_0 : i32
    scf.if %2 {
      %cst_11 = arith.constant 0.000000e+00 : f32
      %13 = vector.broadcast %cst_11 : f32 to vector<8x256xf32>
      %c0_12 = arith.constant 0 : index
      %c0_13 = arith.constant 0 : index
      %14 = vector.load %arg12[%c0_12, %c0_13] : memref<8x256xf32, #tpu.memory_space<vmem>>, vector<8x256xf32>
      tpu.vector_store %arg12[%c0_12, %c0_13], %13 {strides = array<i32>} : memref<8x256xf32, #tpu.memory_space<vmem>>, vector<8x256xf32>,
    } else {
    }
    %c0 = arith.constant 0 : index
    %c0_1 = arith.constant 0 : index
    %c0_2 = arith.constant 0 : index
    %3 = vector.load %arg2[%c0, %c0_1, %c0_2] : memref<8x16x256xbf16, #tpu.memory_space<vmem>>, vector<8x16x256xbf16>
    %4 = vector.shape_cast %3 : vector<8x16x256xbf16> to vector<128x256xbf16>
    %c0_3 = arith.constant 0 : index
    %c0_4 = arith.constant 0 : index
    %5 = vector.load %arg12[%c0_3, %c0_4] : memref<8x256xf32, #tpu.memory_space<vmem>>, vector<8x256xf32>
    %c0_5 = arith.constant 0 : index
    %c0_6 = arith.constant 0 : index
    %6 = vector.load %arg3[%c0_5, %c0_6] : memref<8x128xbf16, #tpu.memory_space<vmem>>, vector<8x128xbf16>
    %cst = arith.constant dense<0.000000e+00> : vector<8x256xf32>
    %7 = tpu.matmul %6, %4, %cst {dimension_numbers = #tpu.dot_dimension_numbers<[1], [0], [0], [1], [0, 0, 1, 1], [], []>} : vector<8x128xbf16>, vector<128x256xbf16>, vector<8x256xf32> -> vector<8x256xf32>
    %8 = arith.addf %5, %7 : vector<8x256xf32>
    %c0_7 = arith.constant 0 : index
    %c0_8 = arith.constant 0 : index
    %9 = vector.load %arg12[%c0_7, %c0_8] : memref<8x256xf32, #tpu.memory_space<vmem>>, vector<8x256xf32>
    tpu.vector_store %arg12[%c0_7, %c0_8], %8 {strides = array<i32>} : memref<8x256xf32, #tpu.memory_space<vmem>>, vector<8x256xf32>,
    %c0_i32_9 = arith.constant 0 : i32
    %10 = arith.cmpi eq, %arg1, %c0_i32_9 : i32
    %11 = arith.extui %10 : i1 to i32
    %c0_i32_10 = arith.constant 0 : i32
    %12 = arith.cmpi ne, %11, %c0_i32_10 : i32
    scf.if %12 {
      %c0_11 = arith.constant 0 : index
      %c0_12 = arith.constant 0 : index
      %13 = vector.load %arg12[%c0_11, %c0_12] : memref<8x256xf32, #tpu.memory_space<vmem>>, vector<8x256xf32>
      %cst_13 = arith.constant 2.500000e-01 : f32
      %14 = vector.broadcast %cst_13 : f32 to vector<8x256xf32>
      %15 = arith.mulf %13, %14 : vector<8x256xf32>
      %16 = arith.truncf %15 : vector<8x256xf32> to vector<8x256xbf16>
      %c0_14 = arith.constant 0 : index
      %c0_15 = arith.constant 0 : index
      %17 = vector.load %arg4[%c0_14, %c0_15] : memref<256x128xbf16, #tpu.memory_space<vmem>>, vector<256x128xbf16>
      %cst_16 = arith.constant dense<0.000000e+00> : vector<8x128xf32>
      %18 = tpu.matmul %16, %17, %cst_16 {dimension_numbers = #tpu.dot_dimension_numbers<[1], [0], [0], [1], [0, 0, 1, 1], [], []>} : vector<8x256xbf16>, vector<256x128xbf16>, vector<8x128xf32> -> vector<8x128xf32>
      %c0_17 = arith.constant 0 : index
      %c0_18 = arith.constant 0 : index
      %19 = vector.load %arg5[%c0_17, %c0_18] : memref<1x128xbf16, #tpu.memory_space<vmem>>, vector<1x128xbf16>
      %20 = arith.extf %19 : vector<1x128xbf16> to vector<1x128xf32>
      %21 = vector.broadcast %20 : vector<1x128xf32> to vector<8x128xf32>
      %22 = arith.addf %18, %21 : vector<8x128xf32>
      %23 = arith.truncf %22 : vector<8x128xf32> to vector<8x128xbf16>
      %c0_19 = arith.constant 0 : index
      %c0_20 = arith.constant 0 : index
      %24 = vector.load %arg6[%c0_19, %c0_20] : memref<128x128xbf16, #tpu.memory_space<vmem>>, vector<128x128xbf16>
      %cst_21 = arith.constant dense<0.000000e+00> : vector<8x128xf32>
      %25 = tpu.matmul %23, %24, %cst_21 {dimension_numbers = #tpu.dot_dimension_numbers<[1], [0], [0], [1], [0, 0, 1, 1], [], []>} : vector<8x128xbf16>, vector<128x128xbf16>, vector<8x128xf32> -> vector<8x128xf32>
      %c0_22 = arith.constant 0 : index
      %c0_23 = arith.constant 0 : index
      %26 = vector.load %arg7[%c0_22, %c0_23] : memref<1x128xbf16, #tpu.memory_space<vmem>>, vector<1x128xbf16>
      %27 = arith.extf %26 : vector<1x128xbf16> to vector<1x128xf32>
      %28 = vector.broadcast %27 : vector<1x128xf32> to vector<8x128xf32>
      %29 = arith.addf %25, %28 : vector<8x128xf32>
      %c0_24 = arith.constant 0 : index
      %c0_25 = arith.constant 0 : index
      %30 = vector.load %arg10[%c0_24, %c0_25] : memref<8x128xf32, #tpu.memory_space<vmem>>, vector<8x128xf32>
      tpu.vector_store %arg10[%c0_24, %c0_25], %29 {strides = array<i32>} : memref<8x128xf32, #tpu.memory_space<vmem>>, vector<8x128xf32>,
      %31 = arith.truncf %29 : vector<8x128xf32> to vector<8x128xbf16>
      %c0_26 = arith.constant 0 : index
      %c0_27 = arith.constant 0 : index
      %32 = vector.load %arg8[%c0_26, %c0_27] : memref<128x128xbf16, #tpu.memory_space<vmem>>, vector<128x128xbf16>
      %cst_28 = arith.constant dense<0.000000e+00> : vector<8x128xf32>
      %33 = tpu.matmul %31, %32, %cst_28 {dimension_numbers = #tpu.dot_dimension_numbers<[1], [0], [0], [1], [0, 0, 1, 1], [], []>} : vector<8x128xbf16>, vector<128x128xbf16>, vector<8x128xf32> -> vector<8x128xf32>
      %c0_29 = arith.constant 0 : index
      %c0_30 = arith.constant 0 : index
      %34 = vector.load %arg9[%c0_29, %c0_30] : memref<1x128xf32, #tpu.memory_space<vmem>>, vector<1x128xf32>
      %35 = vector.broadcast %34 : vector<1x128xf32> to vector<8x128xf32>
      %36 = arith.addf %33, %35 : vector<8x128xf32>
      %c0_31 = arith.constant 0 : index
      %c0_32 = arith.constant 0 : index
      %37 = vector.load %arg11[%c0_31, %c0_32] : memref<8x128xf32, #tpu.memory_space<vmem>>, vector<8x128xf32>
      tpu.vector_store %arg11[%c0_31, %c0_32], %36 {strides = array<i32>} : memref<8x128xf32, #tpu.memory_space<vmem>>, vector<8x128xf32>,
    } else {
    }
    return
  }
  func.func @transform_0(%arg0: i32, %arg1: i32) -> (i32, i32, i32) {
    %c0_i32 = arith.constant 0 : i32
    %c0_i32_0 = arith.constant 0 : i32
    return %arg0, %arg1, %c0_i32 : i32, i32, i32
  }
  func.func @transform_1(%arg0: i32, %arg1: i32) -> (i32, i32) {
    %c0_i32 = arith.constant 0 : i32
    %c0_i32_0 = arith.constant 0 : i32
    %c0_i32_1 = arith.constant 0 : i32
    return %c0_i32, %c0_i32_0 : i32, i32
  }
  func.func @transform_2(%arg0: i32, %arg1: i32) -> (i32, i32) {
    %c0_i32 = arith.constant 0 : i32
    %c0_i32_0 = arith.constant 0 : i32
    %c0_i32_1 = arith.constant 0 : i32
    return %c0_i32, %c0_i32_0 : i32, i32
  }
  func.func @transform_3(%arg0: i32, %arg1: i32) -> (i32, i32) {
    %c0_i32 = arith.constant 0 : i32
    %c0_i32_0 = arith.constant 0 : i32
    %c0_i32_1 = arith.constant 0 : i32
    return %c0_i32, %c0_i32_0 : i32, i32
  }
  func.func @transform_4(%arg0: i32, %arg1: i32) -> (i32, i32) {
    %c0_i32 = arith.constant 0 : i32
    %c0_i32_0 = arith.constant 0 : i32
    %c0_i32_1 = arith.constant 0 : i32
    return %c0_i32, %c0_i32_0 : i32, i32
  }
  func.func @transform_5(%arg0: i32, %arg1: i32) -> (i32, i32) {
    %c0_i32 = arith.constant 0 : i32
    %c0_i32_0 = arith.constant 0 : i32
    %c0_i32_1 = arith.constant 0 : i32
    return %c0_i32, %c0_i32_0 : i32, i32
  }
  func.func @transform_6(%arg0: i32, %arg1: i32) -> (i32, i32) {
    %c0_i32 = arith.constant 0 : i32
    %c0_i32_0 = arith.constant 0 : i32
    %c0_i32_1 = arith.constant 0 : i32
    return %c0_i32, %c0_i32_0 : i32, i32
  }
  func.func @transform_7(%arg0: i32, %arg1: i32) -> (i32, i32) {
    %c0_i32 = arith.constant 0 : i32
    %c0_i32_0 = arith.constant 0 : i32
    %c0_i32_1 = arith.constant 0 : i32
    return %c0_i32, %c0_i32_0 : i32, i32
  }
  func.func @transform_8(%arg0: i32, %arg1: i32) -> (i32, i32) {
    %c0_i32 = arith.constant 0 : i32
    %c0_i32_0 = arith.constant 0 : i32
    return %arg0, %c0_i32 : i32, i32
  }
  func.func @transform_9(%arg0: i32, %arg1: i32) -> (i32, i32) {
    %c0_i32 = arith.constant 0 : i32
    %c0_i32_0 = arith.constant 0 : i32
    return %arg0, %c0_i32 : i32, i32
  }
}

</mosaic_0001>

<llo_original>
// kernel: tpu_custom_call.1
$region0: #{tpu_custom_call.1}
  #allocation0 [shape = 'u32[]', space=smem, size = 0x4, offset = 0x4, fixed_abs, tag = 'smem constant byte address 0x4 - core index']
  #allocation1 [shape = 'u32[144,128]{1,0:T(1,128)}', space=vmem, size = 0x12000, scoped, tag = 'internal scratch']
  #allocation2 [shape = 'f32[8,256]{1,0:T(8,128)}', space=vmem, size = 0x2000, scoped, tag = 'scratch operand']
  %s0 = inlined_call_operand.hbm [shape: bf16[8,16,256], index: 0, kind: input, shape index: {}]
  %s1 = inlined_call_operand.hbm [shape: bf16[8,128], index: 1, kind: input, shape index: {}]
  %s2 = inlined_call_operand.hbm [shape: bf16[256,128], index: 2, kind: input, shape index: {}]
  %s3 = inlined_call_operand.vmem [shape: bf16[1,128], index: 3, kind: input, shape index: {}]
  %s4 = inlined_call_operand.hbm [shape: bf16[128,128], index: 4, kind: input, shape index: {}]
  %s5 = inlined_call_operand.vmem [shape: bf16[1,128], index: 5, kind: input, shape index: {}]
  %s6 = inlined_call_operand.hbm [shape: bf16[128,128], index: 6, kind: input, shape index: {}]
  %s7 = inlined_call_operand.vmem [shape: f32[1,128], index: 7, kind: input, shape index: {}]
  %s8 = inlined_call_operand.hbm [shape: f32[8,128], index: 8, kind: output, shape index: {0}]
  %s9 = inlined_call_operand.hbm [shape: f32[8,128], index: 9, kind: output, shape index: {1}]
  %10 = xla_tuple %s8, %s9
  %s11 = sld [smem:[#allocation0]]
  $region78: #{tpu_custom_call.1} parent=0
    _
  %s13 = ssub.s32 1, %s11
  %s14 = scalar_select 0, %s13, %s11
  $region1: #{tpu_custom_call.1} parent=0
    #allocation3 [shape = 'u8[65536]{0}', space=vmem, size = 0x10000, scoped, tag = 'input window, operand 0, single buffered']
    #allocation4 [shape = 's32[1]{0}', space=sflag, size = 0x4, scoped, tag = 'scoped memory for tpu_custom_call.1']
    #allocation5 [shape = 's32[1]{0}', space=sflag, size = 0x4, scoped, tag = 'scoped memory for tpu_custom_call.1']
    #allocation6 [shape = 'u8[2048]{0}', space=vmem, size = 0x800, scoped, tag = 'input window, operand 1, single buffered']
    #allocation7 [shape = 's32[1]{0}', space=sflag, size = 0x4, scoped, tag = 'scoped memory for tpu_custom_call.1']
    #allocation8 [shape = 'u8[65536]{0}', space=vmem, size = 0x10000, scoped, tag = 'input window, operand 2, single buffered']
    #allocation9 [shape = 'u8[32768]{0}', space=vmem, size = 0x8000, scoped, tag = 'input window, operand 4, single buffered']
    #allocation10 [shape = 's32[1]{0}', space=sflag, size = 0x4, scoped, tag = 'scoped memory for tpu_custom_call.1']
    #allocation11 [shape = 'u8[32768]{0}', space=vmem, size = 0x8000, scoped, tag = 'input window, operand 6, single buffered']
    #allocation12 [shape = 'u8[4096]{0}', space=vmem, size = 0x1000, scoped, tag = 'output window, operand 0, single buffered']
    #allocation13 [shape = 'u8[4096]{0}', space=vmem, size = 0x1000, scoped, tag = 'output window, operand 1, single buffered']
    #allocation14 [shape = 's32[1]{0}', space=sflag, size = 0x4, scoped, tag = 'scoped memory for tpu_custom_call.1']
    %15 = vsyncpa [#allocation4], 0
    %16 = vsyncpa [#allocation7], 0
    %17 = vsyncpa [#allocation10], 0
    %18 = vsyncpa [#allocation5], 0
    %19 = vsyncpa [#allocation14], 0
    // Predicated region
    $region2: #{tpu_custom_call.1} parent=1 // pred_check
      _
    $region3: #{tpu_custom_call.1} parent=1 // pred_check_branch
      %21 = sbr.rel (0) target = $region5
    $region4: #{tpu_custom_call.1} parent=1 // pred_region
      %s23 = ssub.s32 2048, 2048
      %24 = vsyncadd [#allocation4], %s23
      %s25 = sshll.u32 [#allocation3], 4
      %s26 = int_to_ptr.vmem [resolvable:$true] %s25
      %31 = dma.hbm_to_vmem [thread:$0]  %s0, 2048, %s26, [#allocation4], 128, 128, 8
    $region5: #{tpu_custom_call.1} parent=1 // pred_fallthru
      _
    // Predicated region
    $region6: #{tpu_custom_call.1} parent=1 // pred_check
      _
    $region7: #{tpu_custom_call.1} parent=1 // pred_check_branch
      %33 = sbr.rel (0) target = $region9
    $region8: #{tpu_custom_call.1} parent=1 // pred_region
      %s35 = ssub.s32 64, 64
      %36 = vsyncadd [#allocation7], %s35
      %s38 = sshll.u32 [#allocation6], 4
      %s39 = int_to_ptr.vmem [resolvable:$true] %s38
      %41 = dma.hbm_to_vmem [thread:$0]  %s1, 64, %s39, [#allocation7]
    $region9: #{tpu_custom_call.1} parent=1 // pred_fallthru
      _
    // Predicated region
    $region10: #{tpu_custom_call.1} parent=1 // pred_check
      _
    $region11: #{tpu_custom_call.1} parent=1 // pred_check_branch
      %43 = sbr.rel (0) target = $region13
    $region12: #{tpu_custom_call.1} parent=1 // pred_region
      %s45 = ssub.s32 2048, 2048
      %46 = vsyncadd [#allocation7], %s45
      %s47 = sshll.u32 [#allocation8], 4
      %s48 = int_to_ptr.vmem [resolvable:$true] %s47
      %53 = dma.hbm_to_vmem [thread:$0]  %s2, 2048, %s48, [#allocation7], 64, 64, 4
    $region13: #{tpu_custom_call.1} parent=1 // pred_fallthru
      _
    // Predicated region
    $region14: #{tpu_custom_call.1} parent=1 // pred_check
      _
    $region15: #{tpu_custom_call.1} parent=1 // pred_check_branch
      %55 = sbr.rel (0) target = $region17
    $region16: #{tpu_custom_call.1} parent=1 // pred_region
      _
    $region17: #{tpu_custom_call.1} parent=1 // pred_fallthru
      _
    // Predicated region
    $region18: #{tpu_custom_call.1} parent=1 // pred_check
      _
    $region19: #{tpu_custom_call.1} parent=1 // pred_check_branch
      %57 = sbr.rel (0) target = $region21
    $region20: #{tpu_custom_call.1} parent=1 // pred_region
      %s59 = ssub.s32 1024, 1024
      %60 = vsyncadd [#allocation10], %s59
      %s61 = sshll.u32 [#allocation9], 4
      %s62 = int_to_ptr.vmem [resolvable:$true] %s61
      %67 = dma.hbm_to_vmem [thread:$0]  %s4, 1024, %s62, [#allocation10], 64, 64, 4
    $region21: #{tpu_custom_call.1} parent=1 // pred_fallthru
      _
    // Predicated region
    $region22: #{tpu_custom_call.1} parent=1 // pred_check
      _
    $region23: #{tpu_custom_call.1} parent=1 // pred_check_branch
      %69 = sbr.rel (0) target = $region25
    $region24: #{tpu_custom_call.1} parent=1 // pred_region
      _
    $region25: #{tpu_custom_call.1} parent=1 // pred_fallthru
      _
    // Predicated region
    $region26: #{tpu_custom_call.1} parent=1 // pred_check
      _
    $region27: #{tpu_custom_call.1} parent=1 // pred_check_branch
      %71 = sbr.rel (0) target = $region29
    $region28: #{tpu_custom_call.1} parent=1 // pred_region
      %s73 = ssub.s32 1024, 1024
      %74 = vsyncadd [#allocation10], %s73
      %s75 = sshll.u32 [#allocation11], 4
      %s76 = int_to_ptr.vmem [resolvable:$true] %s75
      %81 = dma.hbm_to_vmem [thread:$0]  %s6, 1024, %s76, [#allocation10], 64, 64, 4
    $region29: #{tpu_custom_call.1} parent=1 // pred_fallthru
      _
    // Predicated region
    $region30: #{tpu_custom_call.1} parent=1 // pred_check
      _
    $region31: #{tpu_custom_call.1} parent=1 // pred_check_branch
      %83 = sbr.rel (0) target = $region33
    $region32: #{tpu_custom_call.1} parent=1 // pred_region
      _
    $region33: #{tpu_custom_call.1} parent=1 // pred_fallthru
      _
    // Predicated region
    $region34: #{tpu_custom_call.1} parent=1 // pred_check
      _
    $region35: #{tpu_custom_call.1} parent=1 // pred_check_branch
      %85 = sbr.rel (0) target = $region37
    $region36: #{tpu_custom_call.1} parent=1 // pred_region
      %86 = dma.done [#allocation4], 2048
    $region37: #{tpu_custom_call.1} parent=1 // pred_fallthru
      _
    // Predicated region
    $region38: #{tpu_custom_call.1} parent=1 // pred_check
      _
    $region39: #{tpu_custom_call.1} parent=1 // pred_check_branch
      %88 = sbr.rel (0) target = $region41
    $region40: #{tpu_custom_call.1} parent=1 // pred_region
      %89 = dma.done [#allocation7], 64
    $region41: #{tpu_custom_call.1} parent=1 // pred_fallthru
      _
    // Predicated region
    $region42: #{tpu_custom_call.1} parent=1 // pred_check
      _
    $region43: #{tpu_custom_call.1} parent=1 // pred_check_branch
      %91 = sbr.rel (0) target = $region45
    $region44: #{tpu_custom_call.1} parent=1 // pred_region
      %92 = dma.done [#allocation7], 2048
    $region45: #{tpu_custom_call.1} parent=1 // pred_fallthru
      _
    // Predicated region
    $region46: #{tpu_custom_call.1} parent=1 // pred_check
      _
    $region47: #{tpu_custom_call.1} parent=1 // pred_check_branch
      %94 = sbr.rel (0) target = $region49
    $region48: #{tpu_custom_call.1} parent=1 // pred_region
      %95 = dma.done [#allocation10], 1024
    $region49: #{tpu_custom_call.1} parent=1 // pred_fallthru
      _
    // Predicated region
    $region50: #{tpu_custom_call.1} parent=1 // pred_check
      _
    $region51: #{tpu_custom_call.1} parent=1 // pred_check_branch
      %97 = sbr.rel (0) target = $region53
    $region52: #{tpu_custom_call.1} parent=1 // pred_region
      %98 = dma.done [#allocation10], 1024
    $region53: #{tpu_custom_call.1} parent=1 // pred_fallthru
      _
    %p100 = scmp.eq.s32.totalorder 0, 0
    // Predicated region
    $region54: #{tpu_custom_call.1} parent=1 // pred_check
      %p101 = pneg %p100
    $region55: #{tpu_custom_call.1} parent=1 // pred_check_branch
      %103 = sbr.rel (%p101) target = $region57
    $region56: #{tpu_custom_call.1} parent=1 // pred_region
      %104 = vst [vmem:[#allocation2] sm:$0xff] 0.0
      %105 = vst [vmem:[#allocation2 + $0x8] sm:$0xff] 0.0
    $region57: #{tpu_custom_call.1} parent=1 // pred_fallthru
      _
    %v106 = vld [vmem:[#allocation3] sm:$0xff]
    %v107 = vld [vmem:[#allocation3 + $0x8] sm:$0xff]
    %v108 = vld [vmem:[#allocation3 + $0x10] sm:$0xff]
    %v109 = vld [vmem:[#allocation3 + $0x18] sm:$0xff]
    %v110 = vld [vmem:[#allocation3 + $0x20] sm:$0xff]
    %v111 = vld [vmem:[#allocation3 + $0x28] sm:$0xff]
    %v112 = vld [vmem:[#allocation3 + $0x30] sm:$0xff]
    %v113 = vld [vmem:[#allocation3 + $0x38] sm:$0xff]
    %v114 = vld [vmem:[#allocation3 + $0x40] sm:$0xff]
    %v115 = vld [vmem:[#allocation3 + $0x48] sm:$0xff]
    %v116 = vld [vmem:[#allocation3 + $0x50] sm:$0xff]
    %v117 = vld [vmem:[#allocation3 + $0x58] sm:$0xff]
    %v118 = vld [vmem:[#allocation3 + $0x60] sm:$0xff]
    %v119 = vld [vmem:[#allocation3 + $0x68] sm:$0xff]
    %v120 = vld [vmem:[#allocation3 + $0x70] sm:$0xff]
    %v121 = vld [vmem:[#allocation3 + $0x78] sm:$0xff]
    %v122 = vld [vmem:[#allocation2] sm:$0xff]
    %v123 = vld [vmem:[#allocation2 + $0x8] sm:$0xff]
    %v124 = vld [vmem:[#allocation6] sm:$0xf]
    %v141 = vunpack.c.l.b16 %v106
    %v142 = vunpack.c.h.b16 %v106
    %v143 = vunpack.c.l.b16 %v107
    %v144 = vunpack.c.h.b16 %v107
    %v145 = vunpack.c.l.b16 %v108
    %v146 = vunpack.c.h.b16 %v108
    %v147 = vunpack.c.l.b16 %v109
    %v148 = vunpack.c.h.b16 %v109
    %v149 = vunpack.c.l.b16 %v110
    %v150 = vunpack.c.h.b16 %v110
    %v151 = vunpack.c.l.b16 %v111
    %v152 = vunpack.c.h.b16 %v111
    %v153 = vunpack.c.l.b16 %v112
    %v154 = vunpack.c.h.b16 %v112
    %v155 = vunpack.c.l.b16 %v113
    %v156 = vunpack.c.h.b16 %v113
    %v157 = vunpack.c.l.b16 %v114
    %v158 = vunpack.c.h.b16 %v114
    %v159 = vunpack.c.l.b16 %v115
    %v160 = vunpack.c.h.b16 %v115
    %v161 = vunpack.c.l.b16 %v116
    %v162 = vunpack.c.h.b16 %v116
    %v163 = vunpack.c.l.b16 %v117
    %v164 = vunpack.c.h.b16 %v117
    %v165 = vunpack.c.l.b16 %v118
    %v166 = vunpack.c.h.b16 %v118
    %v167 = vunpack.c.l.b16 %v119
    %v168 = vunpack.c.h.b16 %v119
    %v169 = vunpack.c.l.b16 %v120
    %v170 = vunpack.c.h.b16 %v120
    %v171 = vunpack.c.l.b16 %v121
    %v172 = vunpack.c.h.b16 %v121
    %v173 = vpack.c.b16 %v143, %v141
    %v174 = vpack.c.b16 %v144, %v142
    %v175 = vpack.c.b16 %v147, %v145
    %v176 = vpack.c.b16 %v148, %v146
    %v177 = vpack.c.b16 %v151, %v149
    %v178 = vpack.c.b16 %v152, %v150
    %v179 = vpack.c.b16 %v155, %v153
    %v180 = vpack.c.b16 %v156, %v154
    %v181 = vpack.c.b16 %v159, %v157
    %v182 = vpack.c.b16 %v160, %v158
    %v183 = vpack.c.b16 %v163, %v161
    %v184 = vpack.c.b16 %v164, %v162
    %v185 = vpack.c.b16 %v167, %v165
    %v186 = vpack.c.b16 %v168, %v166
    %v187 = vpack.c.b16 %v171, %v169
    %v188 = vpack.c.b16 %v172, %v170
    %205 = vmatprep.subr.bf16.mxu0 %v174
    %206 = vmatpush1.bf16.msra.mxu0 %v173
    %207 = vmatprep.subr.bf16.mxu0 %v176
    %208 = vmatpush1.bf16.msra.mxu0 %v175
    %209 = vmatprep.subr.bf16.mxu0 %v178
    %210 = vmatpush1.bf16.msra.mxu0 %v177
    %211 = vmatprep.subr.bf16.mxu0 %v180
    %212 = vmatpush1.bf16.msra.mxu0 %v179
    %213 = vmatprep.subr.bf16.mxu0 %v182
    %214 = vmatpush1.bf16.msra.mxu0 %v181
    %215 = vmatprep.subr.bf16.mxu0 %v184
    %216 = vmatpush1.bf16.msra.mxu0 %v183
    %217 = vmatprep.subr.bf16.mxu0 %v186
    %218 = vmatpush1.bf16.msra.mxu0 %v185
    %219 = vmatprep.subr.bf16.mxu0 %v188
    %220 = vmatpush1.bf16.msra.mxu0 %v187
    %221 = vmatprep.subr.bf16.mxu0 0
    %222 = vmatpush1.bf16.msra.mxu0 0
    %223 = vmatprep.subr.bf16.mxu0 0
    %224 = vmatpush1.bf16.msra.mxu0 0
    %225 = vmatprep.subr.bf16.mxu0 0
    %226 = vmatpush1.bf16.msra.mxu0 0
    %227 = vmatprep.subr.bf16.mxu0 0
    %228 = vmatpush1.bf16.msra.mxu0 0
    %229 = vmatprep.subr.bf16.mxu0 0
    %230 = vmatpush1.bf16.msra.mxu0 0
    %231 = vmatprep.subr.bf16.mxu0 0
    %232 = vmatpush1.bf16.msra.mxu0 0
    %233 = vmatprep.subr.bf16.mxu0 0
    %234 = vmatpush1.bf16.msra.mxu0 0
    %235 = vmatprep.subr.bf16.mxu0 0
    %236 = vmatpush1.bf16.msra.mxu0 0
    %237 = vmatprep.mubr.bf16.mxu0 0
    %238 = vmatmul.mubr.bf16.gmra.mrb[0].mxu0 %v124
    %v239 = vpop.f32.mrb[0].mxu0
    %v240 = vadd.f32 0.0, %v239
    %v241 = vpop.f32.mrb[0].mxu0
    %v242 = vadd.f32 0.0, %v241
    %v243 = vpop.f32.mrb[0].mxu0
    %v244 = vpop.f32.mrb[0].mxu0
    %245 = vdwg.mxu0
    %v246 = vadd.f32 %v122, %v240
    %v247 = vadd.f32 %v123, %v242
    %248 = vst [vmem:[#allocation2] sm:$0xff] %v246
    %249 = vst [vmem:[#allocation2 + $0x8] sm:$0xff] %v247
    // Predicated region
    $region58: #{tpu_custom_call.1} parent=1 // pred_check
      %p250 = pneg %p100
    $region59: #{tpu_custom_call.1} parent=1 // pred_check_branch
      %252 = sbr.rel (%p250) target = $region61
    $region60: #{tpu_custom_call.1} parent=1 // pred_region
      %v253 = vld [vmem:[#allocation2] sm:$0xff]
      %v254 = vld [vmem:[#allocation2 + $0x8] sm:$0xff]
      %v255 = vmul.f32 %v253, 0.25
      %v256 = vmul.f32 %v254, 0.25
      %v257 = vpack.c.bf16 %v255, %v255
      %v258 = vpack.c.bf16 %v256, %v256
      %v259 = vld [vmem:[#allocation8] sm:$0xf]
      %v260 = vld [vmem:[#allocation8 + $0x4] sm:$0xf]
      %v261 = vld [vmem:[#allocation8 + $0x8] sm:$0xf]
      %v262 = vld [vmem:[#allocation8 + $0xc] sm:$0xf]
      %v263 = vld [vmem:[#allocation8 + $0x10] sm:$0xf]
      %v264 = vld [vmem:[#allocation8 + $0x14] sm:$0xf]
      %v265 = vld [vmem:[#allocation8 + $0x18] sm:$0xf]
      %v266 = vld [vmem:[#allocation8 + $0x1c] sm:$0xf]
      %v267 = vld [vmem:[#allocation8 + $0x20] sm:$0xf]
      %v268 = vld [vmem:[#allocation8 + $0x24] sm:$0xf]
      %v269 = vld [vmem:[#allocation8 + $0x28] sm:$0xf]
      %v270 = vld [vmem:[#allocation8 + $0x2c] sm:$0xf]
      %v271 = vld [vmem:[#allocation8 + $0x30] sm:$0xf]
      %v272 = vld [vmem:[#allocation8 + $0x34] sm:$0xf]
      %v273 = vld [vmem:[#allocation8 + $0x38] sm:$0xf]
      %v274 = vld [vmem:[#allocation8 + $0x3c] sm:$0xf]
      %v275 = vld [vmem:[#allocation8 + $0x40] sm:$0xf]
      %v276 = vld [vmem:[#allocation8 + $0x44] sm:$0xf]
      %v277 = vld [vmem:[#allocation8 + $0x48] sm:$0xf]
      %v278 = vld [vmem:[#allocation8 + $0x4c] sm:$0xf]
      %v279 = vld [vmem:[#allocation8 + $0x50] sm:$0xf]
      %v280 = vld [vmem:[#allocation8 + $0x54] sm:$0xf]
      %v281 = vld [vmem:[#allocation8 + $0x58] sm:$0xf]
      %v282 = vld [vmem:[#allocation8 + $0x5c] sm:$0xf]
      %v283 = vld [vmem:[#allocation8 + $0x60] sm:$0xf]
      %v284 = vld [vmem:[#allocation8 + $0x64] sm:$0xf]
      %v285 = vld [vmem:[#allocation8 + $0x68] sm:$0xf]
      %v286 = vld [vmem:[#allocation8 + $0x6c] sm:$0xf]
      %v287 = vld [vmem:[#allocation8 + $0x70] sm:$0xf]
      %v288 = vld [vmem:[#allocation8 + $0x74] sm:$0xf]
      %v289 = vld [vmem:[#allocation8 + $0x78] sm:$0xf]
      %v290 = vld [vmem:[#allocation8 + $0x7c] sm:$0xf]
      %v291 = vld [vmem:[%s3] sm:$0x1]
      %v292 = vunpack.c.l.bf16 %v291
      %v293 = vlaneseq
      %v294 = vshrl.u32 %v293, 7
      %v295 = vsub.s32 0, %v294
      %v296 = vrot.slane %v292, %v295
      %v329 = vunpack.c.l.b16 %v259
      %v330 = vunpack.c.l.b16 %v260
      %v331 = vunpack.c.l.b16 %v261
      %v332 = vunpack.c.l.b16 %v262
      %v333 = vunpack.c.l.b16 %v263
      %v334 = vunpack.c.l.b16 %v264
      %v335 = vunpack.c.l.b16 %v265
      %v336 = vunpack.c.l.b16 %v266
      %v337 = vunpack.c.l.b16 %v267
      %v338 = vunpack.c.l.b16 %v268
      %v339 = vunpack.c.l.b16 %v269
      %v340 = vunpack.c.l.b16 %v270
      %v341 = vunpack.c.l.b16 %v271
      %v342 = vunpack.c.l.b16 %v272
      %v343 = vunpack.c.l.b16 %v273
      %v344 = vunpack.c.l.b16 %v274
      %v345 = vunpack.c.l.b16 %v275
      %v346 = vunpack.c.l.b16 %v276
      %v347 = vunpack.c.l.b16 %v277
      %v348 = vunpack.c.l.b16 %v278
      %v349 = vunpack.c.l.b16 %v279
      %v350 = vunpack.c.l.b16 %v280
      %v351 = vunpack.c.l.b16 %v281
      %v352 = vunpack.c.l.b16 %v282
      %v353 = vunpack.c.l.b16 %v283
      %v354 = vunpack.c.l.b16 %v284
      %v355 = vunpack.c.l.b16 %v285
      %v356 = vunpack.c.l.b16 %v286
      %v357 = vunpack.c.l.b16 %v287
      %v358 = vunpack.c.l.b16 %v288
      %v359 = vunpack.c.l.b16 %v289
      %v360 = vunpack.c.l.b16 %v290
      %v361 = vpack.c.b16 %v330, %v329
      %v362 = vpack.c.b16 %v332, %v331
      %v363 = vpack.c.b16 %v334, %v333
      %v364 = vpack.c.b16 %v336, %v335
      %v365 = vpack.c.b16 %v338, %v337
      %v366 = vpack.c.b16 %v340, %v339
      %v367 = vpack.c.b16 %v342, %v341
      %v368 = vpack.c.b16 %v344, %v343
      %v369 = vpack.c.b16 %v346, %v345
      %v370 = vpack.c.b16 %v348, %v347
      %v371 = vpack.c.b16 %v350, %v349
      %v372 = vpack.c.b16 %v352, %v351
      %v373 = vpack.c.b16 %v354, %v353
      %v374 = vpack.c.b16 %v356, %v355
      %v375 = vpack.c.b16 %v358, %v357
      %v376 = vpack.c.b16 %v360, %v359
      %393 = vmatprep.subr.bf16.mxu0 0
      %394 = vmatpush1.bf16.msra.mxu0 %v361
      %395 = vmatprep.subr.bf16.mxu0 0
      %396 = vmatpush1.bf16.msra.mxu0 %v362
      %397 = vmatprep.subr.bf16.mxu0 0
      %398 = vmatpush1.bf16.msra.mxu0 %v363
      %399 = vmatprep.subr.bf16.mxu0 0
      %400 = vmatpush1.bf16.msra.mxu0 %v364
      %401 = vmatprep.subr.bf16.mxu0 0
      %402 = vmatpush1.bf16.msra.mxu0 %v365
      %403 = vmatprep.subr.bf16.mxu0 0
      %404 = vmatpush1.bf16.msra.mxu0 %v366
      %405 = vmatprep.subr.bf16.mxu0 0
      %406 = vmatpush1.bf16.msra.mxu0 %v367
      %407 = vmatprep.subr.bf16.mxu0 0
      %408 = vmatpush1.bf16.msra.mxu0 %v368
      %409 = vmatprep.subr.bf16.mxu0 0
      %410 = vmatpush1.bf16.msra.mxu0 %v369
      %411 = vmatprep.subr.bf16.mxu0 0
      %412 = vmatpush1.bf16.msra.mxu0 %v370
      %413 = vmatprep.subr.bf16.mxu0 0
      %414 = vmatpush1.bf16.msra.mxu0 %v371
      %415 = vmatprep.subr.bf16.mxu0 0
      %416 = vmatpush1.bf16.msra.mxu0 %v372
      %417 = vmatprep.subr.bf16.mxu0 0
      %418 = vmatpush1.bf16.msra.mxu0 %v373
      %419 = vmatprep.subr.bf16.mxu0 0
      %420 = vmatpush1.bf16.msra.mxu0 %v374
      %421 = vmatprep.subr.bf16.mxu0 0
      %422 = vmatpush1.bf16.msra.mxu0 %v375
      %423 = vmatprep.subr.bf16.mxu0 0
      %424 = vmatpush1.bf16.msra.mxu0 %v376
      %425 = vmatprep.mubr.bf16.mxu0 %v258
      %426 = vmatmul.mubr.bf16.gmra.mrb[0].mxu0 %v257
      %v427 = vpop.f32.mrb[0].mxu0
      %v428 = vadd.f32 %v296, %v427
      %v429 = vpop.f32.mrb[0].mxu0
      %v430 = vpop.f32.mrb[0].mxu0
      %v431 = vpop.f32.mrb[0].mxu0
      %432 = vdwg.mxu0
      %v433 = vpack.c.bf16 %v428, %v428
      %v434 = vld [vmem:[#allocation9] sm:$0xf]
      %v435 = vld [vmem:[#allocation9 + $0x4] sm:$0xf]
      %v436 = vld [vmem:[#allocation9 + $0x8] sm:$0xf]
      %v437 = vld [vmem:[#allocation9 + $0xc] sm:$0xf]
      %v438 = vld [vmem:[#allocation9 + $0x10] sm:$0xf]
      %v439 = vld [vmem:[#allocation9 + $0x14] sm:$0xf]
      %v440 = vld [vmem:[#allocation9 + $0x18] sm:$0xf]
      %v441 = vld [vmem:[#allocation9 + $0x1c] sm:$0xf]
      %v442 = vld [vmem:[#allocation9 + $0x20] sm:$0xf]
      %v443 = vld [vmem:[#allocation9 + $0x24] sm:$0xf]
      %v444 = vld [vmem:[#allocation9 + $0x28] sm:$0xf]
      %v445 = vld [vmem:[#allocation9 + $0x2c] sm:$0xf]
      %v446 = vld [vmem:[#allocation9 + $0x30] sm:$0xf]
      %v447 = vld [vmem:[#allocation9 + $0x34] sm:$0xf]
      %v448 = vld [vmem:[#allocation9 + $0x38] sm:$0xf]
      %v449 = vld [vmem:[#allocation9 + $0x3c] sm:$0xf]
      %v450 = vld [vmem:[%s5] sm:$0x1]
      %v451 = vunpack.c.l.bf16 %v450
      %v452 = vlaneseq
      %v453 = vshrl.u32 %v452, 7
      %v454 = vsub.s32 0, %v453
      %v455 = vrot.slane %v451, %v454
      %v472 = vunpack.c.l.b16 %v434
      %v473 = vunpack.c.l.b16 %v435
      %v474 = vunpack.c.l.b16 %v436
      %v475 = vunpack.c.l.b16 %v437
      %v476 = vunpack.c.l.b16 %v438
      %v477 = vunpack.c.l.b16 %v439
      %v478 = vunpack.c.l.b16 %v440
      %v479 = vunpack.c.l.b16 %v441
      %v480 = vunpack.c.l.b16 %v442
      %v481 = vunpack.c.l.b16 %v443
      %v482 = vunpack.c.l.b16 %v444
      %v483 = vunpack.c.l.b16 %v445
      %v484 = vunpack.c.l.b16 %v446
      %v485 = vunpack.c.l.b16 %v447
      %v486 = vunpack.c.l.b16 %v448
      %v487 = vunpack.c.l.b16 %v449
      %v488 = vpack.c.b16 %v473, %v472
      %v489 = vpack.c.b16 %v475, %v474
      %v490 = vpack.c.b16 %v477, %v476
      %v491 = vpack.c.b16 %v479, %v478
      %v492 = vpack.c.b16 %v481, %v480
      %v493 = vpack.c.b16 %v483, %v482
      %v494 = vpack.c.b16 %v485, %v484
      %v495 = vpack.c.b16 %v487, %v486
      %504 = vmatprep.subr.bf16.mxu0 0
      %505 = vmatpush1.bf16.msra.mxu0 %v488
      %506 = vmatprep.subr.bf16.mxu0 0
      %507 = vmatpush1.bf16.msra.mxu0 %v489
      %508 = vmatprep.subr.bf16.mxu0 0
      %509 = vmatpush1.bf16.msra.mxu0 %v490
      %510 = vmatprep.subr.bf16.mxu0 0
      %511 = vmatpush1.bf16.msra.mxu0 %v491
      %512 = vmatprep.subr.bf16.mxu0 0
      %513 = vmatpush1.bf16.msra.mxu0 %v492
      %514 = vmatprep.subr.bf16.mxu0 0
      %515 = vmatpush1.bf16.msra.mxu0 %v493
      %516 = vmatprep.subr.bf16.mxu0 0
      %517 = vmatpush1.bf16.msra.mxu0 %v494
      %518 = vmatprep.subr.bf16.mxu0 0
      %519 = vmatpush1.bf16.msra.mxu0 %v495
      %520 = vmatprep.subr.bf16.mxu0 0
      %521 = vmatpush1.bf16.msra.mxu0 0
      %522 = vmatprep.subr.bf16.mxu0 0
      %523 = vmatpush1.bf16.msra.mxu0 0
      %524 = vmatprep.subr.bf16.mxu0 0
      %525 = vmatpush1.bf16.msra.mxu0 0
      %526 = vmatprep.subr.bf16.mxu0 0
      %527 = vmatpush1.bf16.msra.mxu0 0
      %528 = vmatprep.subr.bf16.mxu0 0
      %529 = vmatpush1.bf16.msra.mxu0 0
      %530 = vmatprep.subr.bf16.mxu0 0
      %531 = vmatpush1.bf16.msra.mxu0 0
      %532 = vmatprep.subr.bf16.mxu0 0
      %533 = vmatpush1.bf16.msra.mxu0 0
      %534 = vmatprep.subr.bf16.mxu0 0
      %535 = vmatpush1.bf16.msra.mxu0 0
      %536 = vmatprep.mubr.bf16.mxu0 0
      %537 = vmatmul.mubr.bf16.gmra.mrb[0].mxu0 %v433
      %v538 = vpop.f32.mrb[0].mxu0
      %v539 = vadd.f32 %v455, %v538
      %v540 = vpop.f32.mrb[0].mxu0
      %v541 = vpop.f32.mrb[0].mxu0
      %v542 = vpop.f32.mrb[0].mxu0
      %543 = vdwg.mxu0
      %544 = vst [vmem:[#allocation12] sm:$0xff] %v539
      %v545 = vpack.c.bf16 %v539, %v539
      %v546 = vld [vmem:[#allocation11] sm:$0xf]
      %v547 = vld [vmem:[#allocation11 + $0x4] sm:$0xf]
      %v548 = vld [vmem:[#allocation11 + $0x8] sm:$0xf]
      %v549 = vld [vmem:[#allocation11 + $0xc] sm:$0xf]
      %v550 = vld [vmem:[#allocation11 + $0x10] sm:$0xf]
      %v551 = vld [vmem:[#allocation11 + $0x14] sm:$0xf]
      %v552 = vld [vmem:[#allocation11 + $0x18] sm:$0xf]
      %v553 = vld [vmem:[#allocation11 + $0x1c] sm:$0xf]
      %v554 = vld [vmem:[#allocation11 + $0x20] sm:$0xf]
      %v555 = vld [vmem:[#allocation11 + $0x24] sm:$0xf]
      %v556 = vld [vmem:[#allocation11 + $0x28] sm:$0xf]
      %v557 = vld [vmem:[#allocation11 + $0x2c] sm:$0xf]
      %v558 = vld [vmem:[#allocation11 + $0x30] sm:$0xf]
      %v559 = vld [vmem:[#allocation11 + $0x34] sm:$0xf]
      %v560 = vld [vmem:[#allocation11 + $0x38] sm:$0xf]
      %v561 = vld [vmem:[#allocation11 + $0x3c] sm:$0xf]
      %v562 = vld [vmem:[%s7] sm:$0x1]
      %v564 = vlaneseq
      %v565 = vshrl.u32 %v564, 7
      %v566 = vsub.s32 0, %v565
      %v567 = vrot.slane %v562, %v566
      %v585 = vunpack.c.l.b16 %v546
      %v586 = vunpack.c.l.b16 %v547
      %v587 = vunpack.c.l.b16 %v548
      %v588 = vunpack.c.l.b16 %v549
      %v589 = vunpack.c.l.b16 %v550
      %v590 = vunpack.c.l.b16 %v551
      %v591 = vunpack.c.l.b16 %v552
      %v592 = vunpack.c.l.b16 %v553
      %v593 = vunpack.c.l.b16 %v554
      %v594 = vunpack.c.l.b16 %v555
      %v595 = vunpack.c.l.b16 %v556
      %v596 = vunpack.c.l.b16 %v557
      %v597 = vunpack.c.l.b16 %v558
      %v598 = vunpack.c.l.b16 %v559
      %v599 = vunpack.c.l.b16 %v560
      %v600 = vunpack.c.l.b16 %v561
      %v601 = vpack.c.b16 %v586, %v585
      %v602 = vpack.c.b16 %v588, %v587
      %v603 = vpack.c.b16 %v590, %v589
      %v604 = vpack.c.b16 %v592, %v591
      %v605 = vpack.c.b16 %v594, %v593
      %v606 = vpack.c.b16 %v596, %v595
      %v607 = vpack.c.b16 %v598, %v597
      %v608 = vpack.c.b16 %v600, %v599
      %617 = vmatprep.subr.bf16.mxu0 0
      %618 = vmatpush1.bf16.msra.mxu0 %v601
      %619 = vmatprep.subr.bf16.mxu0 0
      %620 = vmatpush1.bf16.msra.mxu0 %v602
      %621 = vmatprep.subr.bf16.mxu0 0
      %622 = vmatpush1.bf16.msra.mxu0 %v603
      %623 = vmatprep.subr.bf16.mxu0 0
      %624 = vmatpush1.bf16.msra.mxu0 %v604
      %625 = vmatprep.subr.bf16.mxu0 0
      %626 = vmatpush1.bf16.msra.mxu0 %v605
      %627 = vmatprep.subr.bf16.mxu0 0
      %628 = vmatpush1.bf16.msra.mxu0 %v606
      %629 = vmatprep.subr.bf16.mxu0 0
      %630 = vmatpush1.bf16.msra.mxu0 %v607
      %631 = vmatprep.subr.bf16.mxu0 0
      %632 = vmatpush1.bf16.msra.mxu0 %v608
      %633 = vmatprep.subr.bf16.mxu0 0
      %634 = vmatpush1.bf16.msra.mxu0 0
      %635 = vmatprep.subr.bf16.mxu0 0
      %636 = vmatpush1.bf16.msra.mxu0 0
      %637 = vmatprep.subr.bf16.mxu0 0
      %638 = vmatpush1.bf16.msra.mxu0 0
      %639 = vmatprep.subr.bf16.mxu0 0
      %640 = vmatpush1.bf16.msra.mxu0 0
      %641 = vmatprep.subr.bf16.mxu0 0
      %642 = vmatpush1.bf16.msra.mxu0 0
      %643 = vmatprep.subr.bf16.mxu0 0
      %644 = vmatpush1.bf16.msra.mxu0 0
      %645 = vmatprep.subr.bf16.mxu0 0
      %646 = vmatpush1.bf16.msra.mxu0 0
      %647 = vmatprep.subr.bf16.mxu0 0
      %648 = vmatpush1.bf16.msra.mxu0 0
      %649 = vmatprep.mubr.bf16.mxu0 0
      %650 = vmatmul.mubr.bf16.gmra.mrb[0].mxu0 %v545
      %v651 = vpop.f32.mrb[0].mxu0
      %v652 = vadd.f32 %v567, %v651
      %v653 = vpop.f32.mrb[0].mxu0
      %v654 = vpop.f32.mrb[0].mxu0
      %v655 = vpop.f32.mrb[0].mxu0
      %656 = vdwg.mxu0
      %657 = vst [vmem:[#allocation13] sm:$0xff] %v652
    $region61: #{tpu_custom_call.1} parent=1 // pred_fallthru
      _
    // Predicated region
    $region62: #{tpu_custom_call.1} parent=1 // pred_check
      _
    $region63: #{tpu_custom_call.1} parent=1 // pred_check_branch
      %659 = sbr.rel (0) target = $region65
    $region64: #{tpu_custom_call.1} parent=1 // pred_region
      %s661 = ssub.s32 128, 128
      %662 = vsyncadd [#allocation5], %s661
      %s664 = sshll.u32 [#allocation12], 4
      %s665 = int_to_ptr.vmem [resolvable:$true] %s664
      %667 = dma.vmem_to_hbm [thread:$0]  %s665, 128, %s8, [#allocation5]
    $region65: #{tpu_custom_call.1} parent=1 // pred_fallthru
      _
    // Predicated region
    $region66: #{tpu_custom_call.1} parent=1 // pred_check
      _
    $region67: #{tpu_custom_call.1} parent=1 // pred_check_branch
      %669 = sbr.rel (0) target = $region69
    $region68: #{tpu_custom_call.1} parent=1 // pred_region
      %s671 = ssub.s32 128, 128
      %672 = vsyncadd [#allocation14], %s671
      %s674 = sshll.u32 [#allocation13], 4
      %s675 = int_to_ptr.vmem [resolvable:$true] %s674
      %677 = dma.vmem_to_hbm [thread:$0]  %s675, 128, %s9, [#allocation14]
    $region69: #{tpu_custom_call.1} parent=1 // pred_fallthru
      _
    // Predicated region
    $region70: #{tpu_custom_call.1} parent=1 // pred_check
      _
    $region71: #{tpu_custom_call.1} parent=1 // pred_check_branch
      %679 = sbr.rel (0) target = $region73
    $region72: #{tpu_custom_call.1} parent=1 // pred_region
      %680 = dma.done [#allocation5], 128
    $region73: #{tpu_custom_call.1} parent=1 // pred_fallthru
      _
    // Predicated region
    $region74: #{tpu_custom_call.1} parent=1 // pred_check
      _
    $region75: #{tpu_custom_call.1} parent=1 // pred_check_branch
      %682 = sbr.rel (0) target = $region77
    $region76: #{tpu_custom_call.1} parent=1 // pred_region
      %683 = dma.done [#allocation14], 128
    $region77: #{tpu_custom_call.1} parent=1 // pred_fallthru
      _
    %684 = vsyncpa [#allocation4], 1
    %685 = vsyncpa [#allocation7], 1
    %686 = vsyncpa [#allocation10], 1
    %687 = vsyncpa [#allocation5], 1
    %688 = vsyncpa [#allocation14], 1

// kernel: tpu_custom_call.1
$region0: #{tpu_custom_call.1}
  #allocation0 [shape = 'u32[]', space=smem, size = 0x4, offset = 0x4, fixed_abs, tag = 'smem constant byte address 0x4 - core index']
  #allocation1 [shape = 'u32[144,128]{1,0:T(1,128)}', space=vmem, size = 0x12000, scoped, tag = 'internal scratch']
  #allocation2 [shape = 'f32[8,256]{1,0:T(8,128)}', space=vmem, size = 0x2000, scoped, tag = 'scratch operand']
  %s0 = inlined_call_operand.hbm [shape: bf16[8,16,256], index: 0, kind: input, shape index: {}]
  %s1 = inlined_call_operand.hbm [shape: bf16[8,128], index: 1, kind: input, shape index: {}]
  %s2 = inlined_call_operand.hbm [shape: bf16[256,128], index: 2, kind: input, shape index: {}]
  %s3 = inlined_call_operand.vmem [shape: bf16[1,128], index: 3, kind: input, shape index: {}]
  %s4 = inlined_call_operand.hbm [shape: bf16[128,128], index: 4, kind: input, shape index: {}]
  %s5 = inlined_call_operand.vmem [shape: bf16[1,128], index: 5, kind: input, shape index: {}]
  %s6 = inlined_call_operand.hbm [shape: bf16[128,128], index: 6, kind: input, shape index: {}]
  %s7 = inlined_call_operand.vmem [shape: f32[1,128], index: 7, kind: input, shape index: {}]
  %s8 = inlined_call_operand.hbm [shape: f32[8,128], index: 8, kind: output, shape index: {0}]
  %s9 = inlined_call_operand.hbm [shape: f32[8,128], index: 9, kind: output, shape index: {1}]
  %10 = xla_tuple %s8, %s9
  %s11 = sld [smem:[#allocation0]]
  $region78: #{tpu_custom_call.1} parent=0
    _
  %s13 = ssub.s32 1, %s11
  %s14 = scalar_select 0, %s13, %s11
  $region1: #{tpu_custom_call.1} parent=0
    #allocation3 [shape = 'u8[65536]{0}', space=vmem, size = 0x10000, scoped, tag = 'input window, operand 0, single buffered']
    #allocation4 [shape = 's32[1]{0}', space=sflag, size = 0x4, scoped, tag = 'scoped memory for tpu_custom_call.1']
    #allocation5 [shape = 's32[1]{0}', space=sflag, size = 0x4, scoped, tag = 'scoped memory for tpu_custom_call.1']
    #allocation6 [shape = 'u8[2048]{0}', space=vmem, size = 0x800, scoped, tag = 'input window, operand 1, single buffered']
    #allocation7 [shape = 's32[1]{0}', space=sflag, size = 0x4, scoped, tag = 'scoped memory for tpu_custom_call.1']
    #allocation8 [shape = 'u8[65536]{0}', space=vmem, size = 0x10000, scoped, tag = 'input window, operand 2, single buffered']
    #allocation9 [shape = 'u8[32768]{0}', space=vmem, size = 0x8000, scoped, tag = 'input window, operand 4, single buffered']
    #allocation10 [shape = 's32[1]{0}', space=sflag, size = 0x4, scoped, tag = 'scoped memory for tpu_custom_call.1']
    #allocation11 [shape = 'u8[32768]{0}', space=vmem, size = 0x8000, scoped, tag = 'input window, operand 6, single buffered']
    #allocation12 [shape = 'u8[4096]{0}', space=vmem, size = 0x1000, scoped, tag = 'output window, operand 0, single buffered']
    #allocation13 [shape = 'u8[4096]{0}', space=vmem, size = 0x1000, scoped, tag = 'output window, operand 1, single buffered']
    #allocation14 [shape = 's32[1]{0}', space=sflag, size = 0x4, scoped, tag = 'scoped memory for tpu_custom_call.1']
    %15 = vsyncpa [#allocation4], 0
    %16 = vsyncpa [#allocation7], 0
    %17 = vsyncpa [#allocation10], 0
    %18 = vsyncpa [#allocation5], 0
    %19 = vsyncpa [#allocation14], 0
    // Predicated region
    $region2: #{tpu_custom_call.1} parent=1 // pred_check
      _
    $region3: #{tpu_custom_call.1} parent=1 // pred_check_branch
      %21 = sbr.rel (0) target = $region5
    $region4: #{tpu_custom_call.1} parent=1 // pred_region
      %s23 = ssub.s32 2048, 2048
      %24 = vsyncadd [#allocation4], %s23
      %s25 = sshll.u32 [#allocation3], 4
      %s26 = int_to_ptr.vmem [resolvable:$true] %s25
      %31 = dma.hbm_to_vmem [thread:$0]  %s0, 2048, %s26, [#allocation4], 128, 128, 8
    $region5: #{tpu_custom_call.1} parent=1 // pred_fallthru
      _
    // Predicated region
    $region6: #{tpu_custom_call.1} parent=1 // pred_check
      _
    $region7: #{tpu_custom_call.1} parent=1 // pred_check_branch
      %33 = sbr.rel (0) target = $region9
    $region8: #{tpu_custom_call.1} parent=1 // pred_region
      %s35 = ssub.s32 64, 64
      %36 = vsyncadd [#allocation7], %s35
      %s38 = sshll.u32 [#allocation6], 4
      %s39 = int_to_ptr.vmem [resolvable:$true] %s38
      %41 = dma.hbm_to_vmem [thread:$0]  %s1, 64, %s39, [#allocation7]
    $region9: #{tpu_custom_call.1} parent=1 // pred_fallthru
      _
    // Predicated region
    $region10: #{tpu_custom_call.1} parent=1 // pred_check
      _
    $region11: #{tpu_custom_call.1} parent=1 // pred_check_branch
      %43 = sbr.rel (0) target = $region13
    $region12: #{tpu_custom_call.1} parent=1 // pred_region
      %s45 = ssub.s32 2048, 2048
      %46 = vsyncadd [#allocation7], %s45
      %s47 = sshll.u32 [#allocation8], 4
      %s48 = int_to_ptr.vmem [resolvable:$true] %s47
      %53 = dma.hbm_to_vmem [thread:$0]  %s2, 2048, %s48, [#allocation7], 64, 64, 4
    $region13: #{tpu_custom_call.1} parent=1 // pred_fallthru
      _
    // Predicated region
    $region14: #{tpu_custom_call.1} parent=1 // pred_check
      _
    $region15: #{tpu_custom_call.1} parent=1 // pred_check_branch
      %55 = sbr.rel (0) target = $region17
    $region16: #{tpu_custom_call.1} parent=1 // pred_region
      _
    $region17: #{tpu_custom_call.1} parent=1 // pred_fallthru
      _
    // Predicated region
    $region18: #{tpu_custom_call.1} parent=1 // pred_check
      _
    $region19: #{tpu_custom_call.1} parent=1 // pred_check_branch
      %57 = sbr.rel (0) target = $region21
    $region20: #{tpu_custom_call.1} parent=1 // pred_region
      %s59 = ssub.s32 1024, 1024
      %60 = vsyncadd [#allocation10], %s59
      %s61 = sshll.u32 [#allocation9], 4
      %s62 = int_to_ptr.vmem [resolvable:$true] %s61
      %67 = dma.hbm_to_vmem [thread:$0]  %s4, 1024, %s62, [#allocation10], 64, 64, 4
    $region21: #{tpu_custom_call.1} parent=1 // pred_fallthru
      _
    // Predicated region
    $region22: #{tpu_custom_call.1} parent=1 // pred_check
      _
    $region23: #{tpu_custom_call.1} parent=1 // pred_check_branch
      %69 = sbr.rel (0) target = $region25
    $region24: #{tpu_custom_call.1} parent=1 // pred_region
      _
    $region25: #{tpu_custom_call.1} parent=1 // pred_fallthru
      _
    // Predicated region
    $region26: #{tpu_custom_call.1} parent=1 // pred_check
      _
    $region27: #{tpu_custom_call.1} parent=1 // pred_check_branch
      %71 = sbr.rel (0) target = $region29
    $region28: #{tpu_custom_call.1} parent=1 // pred_region
      %s73 = ssub.s32 1024, 1024
      %74 = vsyncadd [#allocation10], %s73
      %s75 = sshll.u32 [#allocation11], 4
      %s76 = int_to_ptr.vmem [resolvable:$true] %s75
      %81 = dma.hbm_to_vmem [thread:$0]  %s6, 1024, %s76, [#allocation10], 64, 64, 4
    $region29: #{tpu_custom_call.1} parent=1 // pred_fallthru
      _
    // Predicated region
    $region30: #{tpu_custom_call.1} parent=1 // pred_check
      _
    $region31: #{tpu_custom_call.1} parent=1 // pred_check_branch
      %83 = sbr.rel (0) target = $region33
    $region32: #{tpu_custom_call.1} parent=1 // pred_region
      _
    $region33: #{tpu_custom_call.1} parent=1 // pred_fallthru
      _
    // Predicated region
    $region34: #{tpu_custom_call.1} parent=1 // pred_check
      _
    $region35: #{tpu_custom_call.1} parent=1 // pred_check_branch
      %85 = sbr.rel (0) target = $region37
    $region36: #{tpu_custom_call.1} parent=1 // pred_region
      %86 = dma.done [#allocation4], 2048
    $region37: #{tpu_custom_call.1} parent=1 // pred_fallthru
      _
    // Predicated region
    $region38: #{tpu_custom_call.1} parent=1 // pred_check
      _
    $region39: #{tpu_custom_call.1} parent=1 // pred_check_branch
      %88 = sbr.rel (0) target = $region41
    $region40: #{tpu_custom_call.1} parent=1 // pred_region
      %89 = dma.done [#allocation7], 64
    $region41: #{tpu_custom_call.1} parent=1 // pred_fallthru
      _
    // Predicated region
    $region42: #{tpu_custom_call.1} parent=1 // pred_check
      _
    $region43: #{tpu_custom_call.1} parent=1 // pred_check_branch
      %91 = sbr.rel (0) target = $region45
    $region44: #{tpu_custom_call.1} parent=1 // pred_region
      %92 = dma.done [#allocation7], 2048
    $region45: #{tpu_custom_call.1} parent=1 // pred_fallthru
      _
    // Predicated region
    $region46: #{tpu_custom_call.1} parent=1 // pred_check
      _
    $region47: #{tpu_custom_call.1} parent=1 // pred_check_branch
      %94 = sbr.rel (0) target = $region49
    $region48: #{tpu_custom_call.1} parent=1 // pred_region
      %95 = dma.done [#allocation10], 1024
    $region49: #{tpu_custom_call.1} parent=1 // pred_fallthru
      _
    // Predicated region
    $region50: #{tpu_custom_call.1} parent=1 // pred_check
      _
    $region51: #{tpu_custom_call.1} parent=1 // pred_check_branch
      %97 = sbr.rel (0) target = $region53
    $region52: #{tpu_custom_call.1} parent=1 // pred_region
      %98 = dma.done [#allocation10], 1024
    $region53: #{tpu_custom_call.1} parent=1 // pred_fallthru
      _
    %p100 = scmp.eq.s32.totalorder 0, 0
    // Predicated region
    $region54: #{tpu_custom_call.1} parent=1 // pred_check
      %p101 = pneg %p100
    $region55: #{tpu_custom_call.1} parent=1 // pred_check_branch
      %103 = sbr.rel (%p101) target = $region57
    $region56: #{tpu_custom_call.1} parent=1 // pred_region
      %104 = vst [vmem:[#allocation2] sm:$0xff] 0.0
      %105 = vst [vmem:[#allocation2 + $0x8] sm:$0xff] 0.0
    $region57: #{tpu_custom_call.1} parent=1 // pred_fallthru
      _
    %v106 = vld [vmem:[#allocation3] sm:$0xff]
    %v107 = vld [vmem:[#allocation3 + $0x8] sm:$0xff]
    %v108 = vld [vmem:[#allocation3 + $0x10] sm:$0xff]
    %v109 = vld [vmem:[#allocation3 + $0x18] sm:$0xff]
    %v110 = vld [vmem:[#allocation3 + $0x20] sm:$0xff]
    %v111 = vld [vmem:[#allocation3 + $0x28] sm:$0xff]
    %v112 = vld [vmem:[#allocation3 + $0x30] sm:$0xff]
    %v113 = vld [vmem:[#allocation3 + $0x38] sm:$0xff]
    %v114 = vld [vmem:[#allocation3 + $0x40] sm:$0xff]
    %v115 = vld [vmem:[#allocation3 + $0x48] sm:$0xff]
    %v116 = vld [vmem:[#allocation3 + $0x50] sm:$0xff]
    %v117 = vld [vmem:[#allocation3 + $0x58] sm:$0xff]
    %v118 = vld [vmem:[#allocation3 + $0x60] sm:$0xff]
    %v119 = vld [vmem:[#allocation3 + $0x68] sm:$0xff]
    %v120 = vld [vmem:[#allocation3 + $0x70] sm:$0xff]
    %v121 = vld [vmem:[#allocation3 + $0x78] sm:$0xff]
    %v122 = vld [vmem:[#allocation2] sm:$0xff]
    %v123 = vld [vmem:[#allocation2 + $0x8] sm:$0xff]
    %v124 = vld [vmem:[#allocation6] sm:$0xf]
    %v141 = vunpack.c.l.b16 %v106
    %v142 = vunpack.c.h.b16 %v106
    %v143 = vunpack.c.l.b16 %v107
    %v144 = vunpack.c.h.b16 %v107
    %v145 = vunpack.c.l.b16 %v108
    %v146 = vunpack.c.h.b16 %v108
    %v147 = vunpack.c.l.b16 %v109
    %v148 = vunpack.c.h.b16 %v109
    %v149 = vunpack.c.l.b16 %v110
    %v150 = vunpack.c.h.b16 %v110
    %v151 = vunpack.c.l.b16 %v111
    %v152 = vunpack.c.h.b16 %v111
    %v153 = vunpack.c.l.b16 %v112
    %v154 = vunpack.c.h.b16 %v112
    %v155 = vunpack.c.l.b16 %v113
    %v156 = vunpack.c.h.b16 %v113
    %v157 = vunpack.c.l.b16 %v114
    %v158 = vunpack.c.h.b16 %v114
    %v159 = vunpack.c.l.b16 %v115
    %v160 = vunpack.c.h.b16 %v115
    %v161 = vunpack.c.l.b16 %v116
    %v162 = vunpack.c.h.b16 %v116
    %v163 = vunpack.c.l.b16 %v117
    %v164 = vunpack.c.h.b16 %v117
    %v165 = vunpack.c.l.b16 %v118
    %v166 = vunpack.c.h.b16 %v118
    %v167 = vunpack.c.l.b16 %v119
    %v168 = vunpack.c.h.b16 %v119
    %v169 = vunpack.c.l.b16 %v120
    %v170 = vunpack.c.h.b16 %v120
    %v171 = vunpack.c.l.b16 %v121
    %v172 = vunpack.c.h.b16 %v121
    %v173 = vpack.c.b16 %v143, %v141
    %v174 = vpack.c.b16 %v144, %v142
    %v175 = vpack.c.b16 %v147, %v145
    %v176 = vpack.c.b16 %v148, %v146
    %v177 = vpack.c.b16 %v151, %v149
    %v178 = vpack.c.b16 %v152, %v150
    %v179 = vpack.c.b16 %v155, %v153
    %v180 = vpack.c.b16 %v156, %v154
    %v181 = vpack.c.b16 %v159, %v157
    %v182 = vpack.c.b16 %v160, %v158
    %v183 = vpack.c.b16 %v163, %v161
    %v184 = vpack.c.b16 %v164, %v162
    %v185 = vpack.c.b16 %v167, %v165
    %v186 = vpack.c.b16 %v168, %v166
    %v187 = vpack.c.b16 %v171, %v169
    %v188 = vpack.c.b16 %v172, %v170
    %205 = vmatprep.subr.bf16.mxu0 %v174
    %206 = vmatpush1.bf16.msra.mxu0 %v173
    %207 = vmatprep.subr.bf16.mxu0 %v176
    %208 = vmatpush1.bf16.msra.mxu0 %v175
    %209 = vmatprep.subr.bf16.mxu0 %v178
    %210 = vmatpush1.bf16.msra.mxu0 %v177
    %211 = vmatprep.subr.bf16.mxu0 %v180
    %212 = vmatpush1.bf16.msra.mxu0 %v179
    %213 = vmatprep.subr.bf16.mxu0 %v182
    %214 = vmatpush1.bf16.msra.mxu0 %v181
    %215 = vmatprep.subr.bf16.mxu0 %v184
    %216 = vmatpush1.bf16.msra.mxu0 %v183
    %217 = vmatprep.subr.bf16.mxu0 %v186
    %218 = vmatpush1.bf16.msra.mxu0 %v185
    %219 = vmatprep.subr.bf16.mxu0 %v188
    %220 = vmatpush1.bf16.msra.mxu0 %v187
    %221 = vmatprep.subr.bf16.mxu0 0
    %222 = vmatpush1.bf16.msra.mxu0 0
    %223 = vmatprep.subr.bf16.mxu0 0
    %224 = vmatpush1.bf16.msra.mxu0 0
    %225 = vmatprep.subr.bf16.mxu0 0
    %226 = vmatpush1.bf16.msra.mxu0 0
    %227 = vmatprep.subr.bf16.mxu0 0
    %228 = vmatpush1.bf16.msra.mxu0 0
    %229 = vmatprep.subr.bf16.mxu0 0
    %230 = vmatpush1.bf16.msra.mxu0 0
    %231 = vmatprep.subr.bf16.mxu0 0
    %232 = vmatpush1.bf16.msra.mxu0 0
    %233 = vmatprep.subr.bf16.mxu0 0
    %234 = vmatpush1.bf16.msra.mxu0 0
    %235 = vmatprep.subr.bf16.mxu0 0
    %236 = vmatpush1.bf16.msra.mxu0 0
    %237 = vmatprep.mubr.bf16.mxu0 0
    %238 = vmatmul.mubr.bf16.gmra.mrb[0].mxu0 %v124
    %v239 = vpop.f32.mrb[0].mxu0
    %v240 = vadd.f32 0.0, %v239
    %v241 = vpop.f32.mrb[0].mxu0
    %v242 = vadd.f32 0.0, %v241
    %v243 = vpop.f32.mrb[0].mxu0
    %v244 = vpop.f32.mrb[0].mxu0
    %245 = vdwg.mxu0
    %v246 = vadd.f32 %v122, %v240
    %v247 = vadd.f32 %v123, %v242
    %248 = vst [vmem:[#allocation2] sm:$0xff] %v246
    %249 = vst [vmem:[#allocation2 + $0x8] sm:$0xff] %v247
    // Predicated region
    $region58: #{tpu_custom_call.1} parent=1 // pred_check
      %p250 = pneg %p100
    $region59: #{tpu_custom_call.1} parent=1 // pred_check_branch
      %252 = sbr.rel (%p250) target = $region61
    $region60: #{tpu_custom_call.1} parent=1 // pred_region
      %v253 = vld [vmem:[#allocation2] sm:$0xff]
      %v254 = vld [vmem:[#allocation2 + $0x8] sm:$0xff]
      %v255 = vmul.f32 %v253, 0.25
      %v256 = vmul.f32 %v254, 0.25
      %v257 = vpack.c.bf16 %v255, %v255
      %v258 = vpack.c.bf16 %v256, %v256
      %v259 = vld [vmem:[#allocation8] sm:$0xf]
      %v260 = vld [vmem:[#allocation8 + $0x4] sm:$0xf]
      %v261 = vld [vmem:[#allocation8 + $0x8] sm:$0xf]
      %v262 = vld [vmem:[#allocation8 + $0xc] sm:$0xf]
      %v263 = vld [vmem:[#allocation8 + $0x10] sm:$0xf]
      %v264 = vld [vmem:[#allocation8 + $0x14] sm:$0xf]
      %v265 = vld [vmem:[#allocation8 + $0x18] sm:$0xf]
      %v266 = vld [vmem:[#allocation8 + $0x1c] sm:$0xf]
      %v267 = vld [vmem:[#allocation8 + $0x20] sm:$0xf]
      %v268 = vld [vmem:[#allocation8 + $0x24] sm:$0xf]
      %v269 = vld [vmem:[#allocation8 + $0x28] sm:$0xf]
      %v270 = vld [vmem:[#allocation8 + $0x2c] sm:$0xf]
      %v271 = vld [vmem:[#allocation8 + $0x30] sm:$0xf]
      %v272 = vld [vmem:[#allocation8 + $0x34] sm:$0xf]
      %v273 = vld [vmem:[#allocation8 + $0x38] sm:$0xf]
      %v274 = vld [vmem:[#allocation8 + $0x3c] sm:$0xf]
      %v275 = vld [vmem:[#allocation8 + $0x40] sm:$0xf]
      %v276 = vld [vmem:[#allocation8 + $0x44] sm:$0xf]
      %v277 = vld [vmem:[#allocation8 + $0x48] sm:$0xf]
      %v278 = vld [vmem:[#allocation8 + $0x4c] sm:$0xf]
      %v279 = vld [vmem:[#allocation8 + $0x50] sm:$0xf]
      %v280 = vld [vmem:[#allocation8 + $0x54] sm:$0xf]
      %v281 = vld [vmem:[#allocation8 + $0x58] sm:$0xf]
      %v282 = vld [vmem:[#allocation8 + $0x5c] sm:$0xf]
      %v283 = vld [vmem:[#allocation8 + $0x60] sm:$0xf]
      %v284 = vld [vmem:[#allocation8 + $0x64] sm:$0xf]
      %v285 = vld [vmem:[#allocation8 + $0x68] sm:$0xf]
      %v286 = vld [vmem:[#allocation8 + $0x6c] sm:$0xf]
      %v287 = vld [vmem:[#allocation8 + $0x70] sm:$0xf]
      %v288 = vld [vmem:[#allocation8 + $0x74] sm:$0xf]
      %v289 = vld [vmem:[#allocation8 + $0x78] sm:$0xf]
      %v290 = vld [vmem:[#allocation8 + $0x7c] sm:$0xf]
      %v291 = vld [vmem:[%s3] sm:$0x1]
      %v292 = vunpack.c.l.bf16 %v291
      %v293 = vlaneseq
      %v294 = vshrl.u32 %v293, 7
      %v295 = vsub.s32 0, %v294
      %v296 = vrot.slane %v292, %v295
      %v329 = vunpack.c.l.b16 %v259
      %v330 = vunpack.c.l.b16 %v260
      %v331 = vunpack.c.l.b16 %v261
      %v332 = vunpack.c.l.b16 %v262
      %v333 = vunpack.c.l.b16 %v263
      %v334 = vunpack.c.l.b16 %v264
      %v335 = vunpack.c.l.b16 %v265
      %v336 = vunpack.c.l.b16 %v266
      %v337 = vunpack.c.l.b16 %v267
      %v338 = vunpack.c.l.b16 %v268
      %v339 = vunpack.c.l.b16 %v269
      %v340 = vunpack.c.l.b16 %v270
      %v341 = vunpack.c.l.b16 %v271
      %v342 = vunpack.c.l.b16 %v272
      %v343 = vunpack.c.l.b16 %v273
      %v344 = vunpack.c.l.b16 %v274
      %v345 = vunpack.c.l.b16 %v275
      %v346 = vunpack.c.l.b16 %v276
      %v347 = vunpack.c.l.b16 %v277
      %v348 = vunpack.c.l.b16 %v278
      %v349 = vunpack.c.l.b16 %v279
      %v350 = vunpack.c.l.b16 %v280
      %v351 = vunpack.c.l.b16 %v281
      %v352 = vunpack.c.l.b16 %v282
      %v353 = vunpack.c.l.b16 %v283
      %v354 = vunpack.c.l.b16 %v284
      %v355 = vunpack.c.l.b16 %v285
      %v356 = vunpack.c.l.b16 %v286
      %v357 = vunpack.c.l.b16 %v287
      %v358 = vunpack.c.l.b16 %v288
      %v359 = vunpack.c.l.b16 %v289
      %v360 = vunpack.c.l.b16 %v290
      %v361 = vpack.c.b16 %v330, %v329
      %v362 = vpack.c.b16 %v332, %v331
      %v363 = vpack.c.b16 %v334, %v333
      %v364 = vpack.c.b16 %v336, %v335
      %v365 = vpack.c.b16 %v338, %v337
      %v366 = vpack.c.b16 %v340, %v339
      %v367 = vpack.c.b16 %v342, %v341
      %v368 = vpack.c.b16 %v344, %v343
      %v369 = vpack.c.b16 %v346, %v345
      %v370 = vpack.c.b16 %v348, %v347
      %v371 = vpack.c.b16 %v350, %v349
      %v372 = vpack.c.b16 %v352, %v351
      %v373 = vpack.c.b16 %v354, %v353
      %v374 = vpack.c.b16 %v356, %v355
      %v375 = vpack.c.b16 %v358, %v357
      %v376 = vpack.c.b16 %v360, %v359
      %393 = vmatprep.subr.bf16.mxu0 0
      %394 = vmatpush1.bf16.msra.mxu0 %v361
      %395 = vmatprep.subr.bf16.mxu0 0
      %396 = vmatpush1.bf16.msra.mxu0 %v362
      %397 = vmatprep.subr.bf16.mxu0 0
      %398 = vmatpush1.bf16.msra.mxu0 %v363
      %399 = vmatprep.subr.bf16.mxu0 0
      %400 = vmatpush1.bf16.msra.mxu0 %v364
      %401 = vmatprep.subr.bf16.mxu0 0
      %402 = vmatpush1.bf16.msra.mxu0 %v365
      %403 = vmatprep.subr.bf16.mxu0 0
      %404 = vmatpush1.bf16.msra.mxu0 %v366
      %405 = vmatprep.subr.bf16.mxu0 0
      %406 = vmatpush1.bf16.msra.mxu0 %v367
      %407 = vmatprep.subr.bf16.mxu0 0
      %408 = vmatpush1.bf16.msra.mxu0 %v368
      %409 = vmatprep.subr.bf16.mxu0 0
      %410 = vmatpush1.bf16.msra.mxu0 %v369
      %411 = vmatprep.subr.bf16.mxu0 0
      %412 = vmatpush1.bf16.msra.mxu0 %v370
      %413 = vmatprep.subr.bf16.mxu0 0
      %414 = vmatpush1.bf16.msra.mxu0 %v371
      %415 = vmatprep.subr.bf16.mxu0 0
      %416 = vmatpush1.bf16.msra.mxu0 %v372
      %417 = vmatprep.subr.bf16.mxu0 0
      %418 = vmatpush1.bf16.msra.mxu0 %v373
      %419 = vmatprep.subr.bf16.mxu0 0
      %420 = vmatpush1.bf16.msra.mxu0 %v374
      %421 = vmatprep.subr.bf16.mxu0 0
      %422 = vmatpush1.bf16.msra.mxu0 %v375
      %423 = vmatprep.subr.bf16.mxu0 0
      %424 = vmatpush1.bf16.msra.mxu0 %v376
      %425 = vmatprep.mubr.bf16.mxu0 %v258
      %426 = vmatmul.mubr.bf16.gmra.mrb[0].mxu0 %v257
      %v427 = vpop.f32.mrb[0].mxu0
      %v428 = vadd.f32 %v296, %v427
      %v429 = vpop.f32.mrb[0].mxu0
      %v430 = vpop.f32.mrb[0].mxu0
      %v431 = vpop.f32.mrb[0].mxu0
      %432 = vdwg.mxu0
      %v433 = vpack.c.bf16 %v428, %v428
      %v434 = vld [vmem:[#allocation9] sm:$0xf]
      %v435 = vld [vmem:[#allocation9 + $0x4] sm:$0xf]
      %v436 = vld [vmem:[#allocation9 + $0x8] sm:$0xf]
      %v437 = vld [vmem:[#allocation9 + $0xc] sm:$0xf]
      %v438 = vld [vmem:[#allocation9 + $0x10] sm:$0xf]
      %v439 = vld [vmem:[#allocation9 + $0x14] sm:$0xf]
      %v440 = vld [vmem:[#allocation9 + $0x18] sm:$0xf]
      %v441 = vld [vmem:[#allocation9 + $0x1c] sm:$0xf]
      %v442 = vld [vmem:[#allocation9 + $0x20] sm:$0xf]
      %v443 = vld [vmem:[#allocation9 + $0x24] sm:$0xf]
      %v444 = vld [vmem:[#allocation9 + $0x28] sm:$0xf]
      %v445 = vld [vmem:[#allocation9 + $0x2c] sm:$0xf]
      %v446 = vld [vmem:[#allocation9 + $0x30] sm:$0xf]
      %v447 = vld [vmem:[#allocation9 + $0x34] sm:$0xf]
      %v448 = vld [vmem:[#allocation9 + $0x38] sm:$0xf]
      %v449 = vld [vmem:[#allocation9 + $0x3c] sm:$0xf]
      %v450 = vld [vmem:[%s5] sm:$0x1]
      %v451 = vunpack.c.l.bf16 %v450
      %v452 = vlaneseq
      %v453 = vshrl.u32 %v452, 7
      %v454 = vsub.s32 0, %v453
      %v455 = vrot.slane %v451, %v454
      %v472 = vunpack.c.l.b16 %v434
      %v473 = vunpack.c.l.b16 %v435
      %v474 = vunpack.c.l.b16 %v436
      %v475 = vunpack.c.l.b16 %v437
      %v476 = vunpack.c.l.b16 %v438
      %v477 = vunpack.c.l.b16 %v439
      %v478 = vunpack.c.l.b16 %v440
      %v479 = vunpack.c.l.b16 %v441
      %v480 = vunpack.c.l.b16 %v442
      %v481 = vunpack.c.l.b16 %v443
      %v482 = vunpack.c.l.b16 %v444
      %v483 = vunpack.c.l.b16 %v445
      %v484 = vunpack.c.l.b16 %v446
      %v485 = vunpack.c.l.b16 %v447
      %v486 = vunpack.c.l.b16 %v448
      %v487 = vunpack.c.l.b16 %v449
      %v488 = vpack.c.b16 %v473, %v472
      %v489 = vpack.c.b16 %v475, %v474
      %v490 = vpack.c.b16 %v477, %v476
      %v491 = vpack.c.b16 %v479, %v478
      %v492 = vpack.c.b16 %v481, %v480
      %v493 = vpack.c.b16 %v483, %v482
      %v494 = vpack.c.b16 %v485, %v484
      %v495 = vpack.c.b16 %v487, %v486
      %504 = vmatprep.subr.bf16.mxu0 0
      %505 = vmatpush1.bf16.msra.mxu0 %v488
      %506 = vmatprep.subr.bf16.mxu0 0
      %507 = vmatpush1.bf16.msra.mxu0 %v489
      %508 = vmatprep.subr.bf16.mxu0 0
      %509 = vmatpush1.bf16.msra.mxu0 %v490
      %510 = vmatprep.subr.bf16.mxu0 0
      %511 = vmatpush1.bf16.msra.mxu0 %v491
      %512 = vmatprep.subr.bf16.mxu0 0
      %513 = vmatpush1.bf16.msra.mxu0 %v492
      %514 = vmatprep.subr.bf16.mxu0 0
      %515 = vmatpush1.bf16.msra.mxu0 %v493
      %516 = vmatprep.subr.bf16.mxu0 0
      %517 = vmatpush1.bf16.msra.mxu0 %v494
      %518 = vmatprep.subr.bf16.mxu0 0
      %519 = vmatpush1.bf16.msra.mxu0 %v495
      %520 = vmatprep.subr.bf16.mxu0 0
      %521 = vmatpush1.bf16.msra.mxu0 0
      %522 = vmatprep.subr.bf16.mxu0 0
      %523 = vmatpush1.bf16.msra.mxu0 0
      %524 = vmatprep.subr.bf16.mxu0 0
      %525 = vmatpush1.bf16.msra.mxu0 0
      %526 = vmatprep.subr.bf16.mxu0 0
      %527 = vmatpush1.bf16.msra.mxu0 0
      %528 = vmatprep.subr.bf16.mxu0 0
      %529 = vmatpush1.bf16.msra.mxu0 0
      %530 = vmatprep.subr.bf16.mxu0 0
      %531 = vmatpush1.bf16.msra.mxu0 0
      %532 = vmatprep.subr.bf16.mxu0 0
      %533 = vmatpush1.bf16.msra.mxu0 0
      %534 = vmatprep.subr.bf16.mxu0 0
      %535 = vmatpush1.bf16.msra.mxu0 0
      %536 = vmatprep.mubr.bf16.mxu0 0
      %537 = vmatmul.mubr.bf16.gmra.mrb[0].mxu0 %v433
      %v538 = vpop.f32.mrb[0].mxu0
      %v539 = vadd.f32 %v455, %v538
      %v540 = vpop.f32.mrb[0].mxu0
      %v541 = vpop.f32.mrb[0].mxu0
      %v542 = vpop.f32.mrb[0].mxu0
      %543 = vdwg.mxu0
      %544 = vst [vmem:[#allocation12] sm:$0xff] %v539
      %v545 = vpack.c.bf16 %v539, %v539
      %v546 = vld [vmem:[#allocation11] sm:$0xf]
      %v547 = vld [vmem:[#allocation11 + $0x4] sm:$0xf]
      %v548 = vld [vmem:[#allocation11 + $0x8] sm:$0xf]
      %v549 = vld [vmem:[#allocation11 + $0xc] sm:$0xf]
      %v550 = vld [vmem:[#allocation11 + $0x10] sm:$0xf]
      %v551 = vld [vmem:[#allocation11 + $0x14] sm:$0xf]
      %v552 = vld [vmem:[#allocation11 + $0x18] sm:$0xf]
      %v553 = vld [vmem:[#allocation11 + $0x1c] sm:$0xf]
      %v554 = vld [vmem:[#allocation11 + $0x20] sm:$0xf]
      %v555 = vld [vmem:[#allocation11 + $0x24] sm:$0xf]
      %v556 = vld [vmem:[#allocation11 + $0x28] sm:$0xf]
      %v557 = vld [vmem:[#allocation11 + $0x2c] sm:$0xf]
      %v558 = vld [vmem:[#allocation11 + $0x30] sm:$0xf]
      %v559 = vld [vmem:[#allocation11 + $0x34] sm:$0xf]
      %v560 = vld [vmem:[#allocation11 + $0x38] sm:$0xf]
      %v561 = vld [vmem:[#allocation11 + $0x3c] sm:$0xf]
      %v562 = vld [vmem:[%s7] sm:$0x1]
      %v564 = vlaneseq
      %v565 = vshrl.u32 %v564, 7
      %v566 = vsub.s32 0, %v565
      %v567 = vrot.slane %v562, %v566
      %v585 = vunpack.c.l.b16 %v546
      %v586 = vunpack.c.l.b16 %v547
      %v587 = vunpack.c.l.b16 %v548
      %v588 = vunpack.c.l.b16 %v549
      %v589 = vunpack.c.l.b16 %v550
      %v590 = vunpack.c.l.b16 %v551
      %v591 = vunpack.c.l.b16 %v552
      %v592 = vunpack.c.l.b16 %v553
      %v593 = vunpack.c.l.b16 %v554
      %v594 = vunpack.c.l.b16 %v555
      %v595 = vunpack.c.l.b16 %v556
      %v596 = vunpack.c.l.b16 %v557
      %v597 = vunpack.c.l.b16 %v558
      %v598 = vunpack.c.l.b16 %v559
      %v599 = vunpack.c.l.b16 %v560
      %v600 = vunpack.c.l.b16 %v561
      %v601 = vpack.c.b16 %v586, %v585
      %v602 = vpack.c.b16 %v588, %v587
      %v603 = vpack.c.b16 %v590, %v589
      %v604 = vpack.c.b16 %v592, %v591
      %v605 = vpack.c.b16 %v594, %v593
      %v606 = vpack.c.b16 %v596, %v595
      %v607 = vpack.c.b16 %v598, %v597
      %v608 = vpack.c.b16 %v600, %v599
      %617 = vmatprep.subr.bf16.mxu0 0
      %618 = vmatpush1.bf16.msra.mxu0 %v601
      %619 = vmatprep.subr.bf16.mxu0 0
      %620 = vmatpush1.bf16.msra.mxu0 %v602
      %621 = vmatprep.subr.bf16.mxu0 0
      %622 = vmatpush1.bf16.msra.mxu0 %v603
      %623 = vmatprep.subr.bf16.mxu0 0
      %624 = vmatpush1.bf16.msra.mxu0 %v604
      %625 = vmatprep.subr.bf16.mxu0 0
      %626 = vmatpush1.bf16.msra.mxu0 %v605
      %627 = vmatprep.subr.bf16.mxu0 0
      %628 = vmatpush1.bf16.msra.mxu0 %v606
      %629 = vmatprep.subr.bf16.mxu0 0
      %630 = vmatpush1.bf16.msra.mxu0 %v607
      %631 = vmatprep.subr.bf16.mxu0 0
      %632 = vmatpush1.bf16.msra.mxu0 %v608
      %633 = vmatprep.subr.bf16.mxu0 0
      %634 = vmatpush1.bf16.msra.mxu0 0
      %635 = vmatprep.subr.bf16.mxu0 0
      %636 = vmatpush1.bf16.msra.mxu0 0
      %637 = vmatprep.subr.bf16.mxu0 0
      %638 = vmatpush1.bf16.msra.mxu0 0
      %639 = vmatprep.subr.bf16.mxu0 0
      %640 = vmatpush1.bf16.msra.mxu0 0
      %641 = vmatprep.subr.bf16.mxu0 0
      %642 = vmatpush1.bf16.msra.mxu0 0
      %643 = vmatprep.subr.bf16.mxu0 0
      %644 = vmatpush1.bf16.msra.mxu0 0
      %645 = vmatprep.subr.bf16.mxu0 0
      %646 = vmatpush1.bf16.msra.mxu0 0
      %647 = vmatprep.subr.bf16.mxu0 0
      %648 = vmatpush1.bf16.msra.mxu0 0
      %649 = vmatprep.mubr.bf16.mxu0 0
      %650 = vmatmul.mubr.bf16.gmra.mrb[0].mxu0 %v545
      %v651 = vpop.f32.mrb[0].mxu0
      %v652 = vadd.f32 %v567, %v651
      %v653 = vpop.f32.mrb[0].mxu0
      %v654 = vpop.f32.mrb[0].mxu0
      %v655 = vpop.f32.mrb[0].mxu0
      %656 = vdwg.mxu0
      %657 = vst [vmem:[#allocation13] sm:$0xff] %v652
    $region61: #{tpu_custom_call.1} parent=1 // pred_fallthru
      _
    // Predicated region
    $region62: #{tpu_custom_call.1} parent=1 // pred_check
      _
    $region63: #{tpu_custom_call.1} parent=1 // pred_check_branch
      %659 = sbr.rel (0) target = $region65
    $region64: #{tpu_custom_call.1} parent=1 // pred_region
      %s661 = ssub.s32 128, 128
      %662 = vsyncadd [#allocation5], %s661
      %s664 = sshll.u32 [#allocation12], 4
      %s665 = int_to_ptr.vmem [resolvable:$true] %s664
      %667 = dma.vmem_to_hbm [thread:$0]  %s665, 128, %s8, [#allocation5]
    $region65: #{tpu_custom_call.1} parent=1 // pred_fallthru
      _
    // Predicated region
    $region66: #{tpu_custom_call.1} parent=1 // pred_check
      _
    $region67: #{tpu_custom_call.1} parent=1 // pred_check_branch
      %669 = sbr.rel (0) target = $region69
    $region68: #{tpu_custom_call.1} parent=1 // pred_region
      %s671 = ssub.s32 128, 128
      %672 = vsyncadd [#allocation14], %s671
      %s674 = sshll.u32 [#allocation13], 4
      %s675 = int_to_ptr.vmem [resolvable:$true] %s674
      %677 = dma.vmem_to_hbm [thread:$0]  %s675, 128, %s9, [#allocation14]
    $region69: #{tpu_custom_call.1} parent=1 // pred_fallthru
      _
    // Predicated region
    $region70: #{tpu_custom_call.1} parent=1 // pred_check
      _
    $region71: #{tpu_custom_call.1} parent=1 // pred_check_branch
      %679 = sbr.rel (0) target = $region73
    $region72: #{tpu_custom_call.1} parent=1 // pred_region
      %680 = dma.done [#allocation5], 128
    $region73: #{tpu_custom_call.1} parent=1 // pred_fallthru
      _
    // Predicated region
    $region74: #{tpu_custom_call.1} parent=1 // pred_check
      _
    $region75: #{tpu_custom_call.1} parent=1 // pred_check_branch
      %682 = sbr.rel (0) target = $region77
    $region76: #{tpu_custom_call.1} parent=1 // pred_region
      %683 = dma.done [#allocation14], 128
    $region77: #{tpu_custom_call.1} parent=1 // pred_fallthru
      _
    %684 = vsyncpa [#allocation4], 1
    %685 = vsyncpa [#allocation7], 1
    %686 = vsyncpa [#allocation10], 1
    %687 = vsyncpa [#allocation5], 1
    %688 = vsyncpa [#allocation14], 1

</llo_original>
